<compile_context>
chip_gen: v7x
topology: tpu7x:2x2x1
jax: 0.10.0
libtpu: 0.0.40
codegen_flags: <defaults>
</compile_context>

<pallas_src>
import functools

import jax
import jax.numpy as jnp
from jax import lax
from jax.experimental import pallas as pl
from jax.experimental.pallas import tpu as pltpu

LANE = 128


def _round_up(x, m):
    return ((x + m - 1) // m) * m


# ---------------------------------------------------------------------------
# Fused Pallas kernel: n_layers x (SplineConv -> mean agg -> +root -> +bias
#                                  -> ELU), grid = (layer, edge_tile)
# ---------------------------------------------------------------------------
def _spline_sa_kernel(n_layers, cin_max, k_pad, w_pad, drop_act,
                      # scalar prefetch (SMEM): per-edge-tile dst-window start
                      dmin_ref,
                      # VMEM inputs
                      x_ref, src_ref, dst_ref, b_ref, w2_ref, wroot_ref,
                      bias_ref, invdeg_ref,
                      # VMEM output (resident node slab)
                      o_ref,
                      # VMEM scratch
                      h_ref, acc_ref, p_ref):
    l = pl.program_id(0)
    t = pl.program_id(1)
    n_tiles = pl.num_programs(1)
    edge_tile = b_ref.shape[0]
    n_pad = h_ref.shape[0]

    # ---- load the module input once; reset the per-layer accumulator -------
    @pl.when((l == 0) & (t == 0))
    def _():
        h_ref[...] = x_ref[...]

    @pl.when(t == 0)
    def _():
        acc_ref[...] = jnp.zeros_like(acc_ref)

    # ---- vectorized source-row gather: one-hot select on the MXU -----------
    # TODO(synk): O(edge_tile * N_pad) select; fine for small point-cloud
    #             graphs, needs a DMA/row-gather path for N_pad >> few thousand.
    src = src_ref[...]                                         # [tile_e, 1] i32
    node_iota = lax.broadcasted_iota(jnp.int32, (edge_tile, n_pad), 1)
    gsel = jnp.where(src == node_iota, 1.0, 0.0).astype(jnp.float32)
    x_src = jnp.dot(gsel, h_ref[...],
                    preferred_element_type=jnp.float32)        # [tile_e, 128]

    # ---- fused per-edge message matmul --------------------------------------
    #   msg[e,o] = sum_{c,k} B[e,k] * x_src[e,c] * W[k,c,o]
    # as one [tile_e, Cin*K_pad] @ [Cin*K_pad, Cout_pad] bf16 contraction.
    b = b_ref[...].astype(jnp.float32)                         # [tile_e, k_pad]
    for c in range(cin_max):                                   # static unroll
        p_ref[:, c * k_pad:(c + 1) * k_pad] = (
            b * x_src[:, c:c + 1]).astype(jnp.bfloat16)
    msg = jnp.dot(p_ref[...], w2_ref[...],
                  preferred_element_type=jnp.float32)          # [tile_e, 128]

    # ---- windowed one-hot scatter-add (edges pre-sorted by dst) -------------
    d0 = pl.multiple_of(dmin_ref[t], 8)
    dst = dst_ref[...]                                         # [tile_e, 1] i32
    win_iota = lax.broadcasted_iota(jnp.int32, (edge_tile, w_pad), 1) + d0
    ssel = jnp.where(dst == win_iota, 1.0, 0.0).astype(jnp.float32)
    upd = lax.dot_general(ssel, msg, (((0,), (0,)), ((), ())),
                          preferred_element_type=jnp.float32)  # [w_pad, 128]
    acc_ref[pl.ds(d0, w_pad), :] = acc_ref[pl.ds(d0, w_pad), :] + upd

    # ---- finalize the layer on its last edge tile ----------------------------
    @pl.when(t == n_tiles - 1)
    def _():
        agg = acc_ref[...] * invdeg_ref[...]                   # mean aggregation
        root = jnp.dot(h_ref[...].astype(jnp.bfloat16), wroot_ref[...],
                       preferred_element_type=jnp.float32)
        out = agg + root + bias_ref[...]
        # ELU(alpha=1) with expm1 precision:
        #   expm1(x) = 2*tanh(x/2) / (1 - tanh(x/2))
        tneg = jnp.tanh(0.5 * jnp.minimum(out, 0.0))
        elu = jnp.where(out > 0.0, out, (2.0 * tneg) / (1.0 - tneg))
        if drop_act:
            out = jnp.where(l < n_layers - 1, elu, out)
        else:
            out = elu
        h_ref[...] = out            # input of the next layer (resident scratch)
        o_ref[...] = out            # resident output; last layer's write wins


def spline_sa_forward(x_pad, src2d, dst2d, basis_bf16, dmin, inv_deg,
                      w2_all, wroot_all, bias_all, *, n_layers, cin_max,
                      k_pad, w_pad, drop_act, edge_tile, vmem_limit_bytes):
    n_pad = x_pad.shape[0]
    e_pad = basis_bf16.shape[0]
    n_tiles = e_pad // edge_tile
    kernel = functools.partial(_spline_sa_kernel, n_layers, cin_max, k_pad,
                               w_pad, drop_act)
    return pl.pallas_call(
        kernel,
        out_shape=jax.ShapeDtypeStruct((n_pad, LANE), jnp.float32),
        grid_spec=pltpu.PrefetchScalarGridSpec(
            num_scalar_prefetch=1,                  # per-tile window start only
            grid=(n_layers, n_tiles),
            in_specs=[
                # node features (resident slab)
                pl.BlockSpec((n_pad, LANE), lambda l, t, dm: (0, 0)),
                # per-tile source / destination indices (VMEM, blocked)
                pl.BlockSpec((edge_tile, 1), lambda l, t, dm: (t, 0)),
                pl.BlockSpec((edge_tile, 1), lambda l, t, dm: (t, 0)),
                # dense B-spline basis (bf16), blocked per edge tile
                pl.BlockSpec((edge_tile, k_pad), lambda l, t, dm: (t, 0)),
                # per-layer weights (leading layer dim squeezed)
                pl.BlockSpec((None, cin_max * k_pad, LANE),
                             lambda l, t, dm: (l, 0, 0)),
                pl.BlockSpec((None, LANE, LANE), lambda l, t, dm: (l, 0, 0)),
                pl.BlockSpec((None, 1, LANE), lambda l, t, dm: (l, 0, 0)),
                # mean-aggregation normalizer (resident)
                pl.BlockSpec((n_pad, 1), lambda l, t, dm: (0, 0)),
            ],
            out_specs=pl.BlockSpec((n_pad, LANE), lambda l, t, dm: (0, 0)),
            scratch_shapes=[
                pltpu.VMEM((n_pad, LANE), jnp.float32),                 # h
                pltpu.VMEM((n_pad, LANE), jnp.float32),                 # acc
                pltpu.VMEM((edge_tile, cin_max * k_pad), jnp.bfloat16), # p_all
            ],
        ),
        compiler_params=pltpu.CompilerParams(
            dimension_semantics=("arbitrary", "arbitrary"),
            # NOTE: reduce to <=48 MiB when targeting v7x (64 MiB physical VMEM).
            vmem_limit_bytes=vmem_limit_bytes,
        ),
    )(dmin, x_pad, src2d, dst2d, basis_bf16, w2_all, wroot_all, bias_all,
      inv_deg)


# ---------------------------------------------------------------------------
# Glue: B-spline basis (matches torch_spline_conv, degree=1, open spline)
# ---------------------------------------------------------------------------
def spline_basis(pseudo, kernel_size, degree=1):
    assert degree == 1  # TODO(synk): only linear (degree=1) B-splines implemented
    e, dim = pseudo.shape
    s_total = (degree + 1) ** dim
    k_total = kernel_size ** dim
    v = pseudo * (kernel_size - 1)          # open spline scaling
    bot = jnp.floor(v)
    frac = v - bot
    bot = bot.astype(jnp.int32)
    basis_cols, wi_cols = [], []
    for s in range(s_total):
        b = jnp.ones((e,), jnp.float32)
        wi = jnp.zeros((e,), jnp.int32)
        offset = 1
        for d in range(dim):
            k_mod = (s // ((degree + 1) ** d)) % (degree + 1)
            b = b * (frac[:, d] if k_mod == 1 else (1.0 - frac[:, d]))
            wi = wi + ((bot[:, d] + k_mod) % kernel_size) * offset
            offset *= kernel_size
        basis_cols.append(b)
        wi_cols.append(wi)
    basis = jnp.stack(basis_cols, axis=1)   # [E, S]
    wi = jnp.stack(wi_cols, axis=1)         # [E, S]
    b_dense = jnp.zeros((e, k_total), jnp.float32)
    for s in range(s_total):
        b_dense = b_dense + basis[:, s:s + 1] * jax.nn.one_hot(
            wi[:, s], k_total, dtype=jnp.float32)
    return basis, wi, b_dense               # sparse (for ref) + dense [E, K]


# ---------------------------------------------------------------------------
# Module
# ---------------------------------------------------------------------------
class SplineCNNSAModulePallas:
    def __init__(self, in_channels, hidden_channels, out_channels, dim=3,
                 n_layers=3, kernel_size=5, patch_size=0.25, degree=1,
                 drop_act=False, key=None):
        assert n_layers >= 2, 'Number of layers should be at least 2'
        assert degree == 1
        # TODO(synk): channel tiling for >128 channels not implemented.
        assert max(in_channels, hidden_channels, out_channels) <= LANE
        self.patch_size = patch_size
        self.kernel_size = kernel_size
        self.dim = dim
        self.degree = degree
        self.n_layers = n_layers
        self.drop_act = drop_act
        self.cin_max = max(in_channels, hidden_channels)
        k_total = kernel_size ** dim
        if key is None:
            key = jax.random.PRNGKey(0)
        self.params = []
        for i in range(n_layers):
            cin = in_channels if i == 0 else hidden_channels
            cout = out_channels if i == n_layers - 1 else hidden_channels
            key, k1, k2 = jax.random.split(key, 3)
            self.params.append(dict(
                w=0.1 * jax.random.normal(k1, (k_total, cin, cout), jnp.float32),
                w_root=0.1 * jax.random.normal(k2, (cin, cout), jnp.float32),
                bias=jnp.zeros((cout,), jnp.float32),
            ))

    def __call__(self, x, pos, batch, idx, edge_index, *, edge_tile=512,
                 vmem_limit_bytes=64 * 1024 * 1024):
        src = edge_index[0].astype(jnp.int32)
        dst = edge_index[1].astype(jnp.int32)
        n = x.shape[0]
        e = int(src.shape[0])
        k_total = self.kernel_size ** self.dim
        k_pad = _round_up(k_total, LANE)
        n_pad = _round_up(n, 8)
        out_ch = self.params[-1]['w'].shape[2]
        cin_max = self.cin_max

        edge_tile = max(16, min(edge_tile, _round_up(e, 16)))
        assert edge_tile % 16 == 0
        e_pad = _round_up(e, edge_tile)
        n_tiles = e_pad // edge_tile
        # TODO(synk): one-hot MXU gather scales with N_pad; add a row-gather /
        #             DMA-gather path before using this on node-heavy graphs.
        assert n_pad <= 4096

        # ---- X-independent graph preprocessing (shared by all layers) ------
        pseudo = jnp.clip((pos[dst] - pos[src]) / self.patch_size + 0.5, 0.0, 1.0)
        _, _, b_dense = spline_basis(pseudo, self.kernel_size, self.degree)

        # sort edges by destination so each edge tile hits a contiguous window
        perm = jnp.argsort(dst)
        src_s, dst_s, b_s = src[perm], dst[perm], b_dense[perm]

        pad_e = e_pad - e
        # pad indices with their last (valid) value; padded basis rows are zero
        # so padded edges contribute nothing.
        src_pad = jnp.pad(src_s, (0, pad_e), mode='edge').reshape(e_pad, 1)
        dst_pad = jnp.pad(dst_s, (0, pad_e), mode='edge')
        basis_pad = jnp.pad(b_s, ((0, pad_e), (0, k_pad - k_total))
                            ).astype(jnp.bfloat16)

        # per-tile destination windows (dst-sorted => contiguous per tile)
        # TODO(synk): computed eagerly from concrete indices; hoist if jitting.
        dst_tiles = dst_pad.reshape(n_tiles, edge_tile)
        d_lo = (jnp.min(dst_tiles, axis=1) // 8) * 8
        w_req = int(jnp.max(jnp.max(dst_tiles, axis=1) - d_lo + 1))
        w_pad = min(_round_up(w_req, 8), n_pad)
        dmin = jnp.minimum(d_lo, n_pad - w_pad).astype(jnp.int32)
        dst2d = dst_pad.reshape(e_pad, 1)

        # mean-aggregation normalizer (isolated nodes divide by 1)
        deg = jax.ops.segment_sum(jnp.ones((e,), jnp.float32), dst,
                                  num_segments=n)
        inv_deg = 1.0 / jnp.maximum(deg, 1.0)
        inv_deg = jnp.pad(inv_deg, (0, n_pad - n), constant_values=1.0)[:, None]

        # node features padded to a lane-dense [N_pad, 128] f32 slab
        h0 = jnp.pad(x.astype(jnp.float32),
                     ((0, n_pad - n), (0, LANE - x.shape[1])))

        # per-layer weights, stacked so one fused kernel handles every layer
        w2_list, wroot_list, bias_list = [], [], []
        for p in self.params:
            k_t, cin, cout = p['w'].shape
            w2 = jnp.transpose(p['w'], (1, 0, 2))              # [cin, K, cout]
            w2 = jnp.pad(w2, ((0, cin_max - cin), (0, k_pad - k_t),
                              (0, LANE - cout)))
            w2_list.append(
                w2.reshape(cin_max * k_pad, LANE).astype(jnp.bfloat16))
            wroot_list.append(jnp.pad(p['w_root'],
                                      ((0, LANE - cin), (0, LANE - cout))
                                      ).astype(jnp.bfloat16))
            bias_list.append(jnp.pad(p['bias'], (0, LANE - cout)
                                     ).astype(jnp.float32)[None, :])
        w2_all = jnp.stack(w2_list)        # [L, cin_max*K_pad, 128] bf16
        wroot_all = jnp.stack(wroot_list)  # [L, 128, 128] bf16
        bias_all = jnp.stack(bias_list)    # [L, 1, 128] f32

        h = spline_sa_forward(h0, src_pad, dst2d, basis_pad, dmin, inv_deg,
                              w2_all, wroot_all, bias_all,
                              n_layers=self.n_layers, cin_max=cin_max,
                              k_pad=k_pad, w_pad=w_pad, drop_act=self.drop_act,
                              edge_tile=edge_tile,
                              vmem_limit_bytes=vmem_limit_bytes)

        out = h[:n, :out_ch]
        if idx is not None:
            out, pos, batch = out[idx], pos[idx], batch[idx]
        return out, pos, batch


# ---------------------------------------------------------------------------
# Pure-JAX reference (sparse basis, segment ops) for validation
# ---------------------------------------------------------------------------
def reference_forward(module, x, pos, batch, idx, edge_index):
    src, dst = edge_index[0], edge_index[1]
    n = x.shape[0]
    pseudo = jnp.clip((pos[dst] - pos[src]) / module.patch_size + 0.5, 0.0, 1.0)
    basis, wi, _ = spline_basis(pseudo, module.kernel_size, module.degree)
    deg = jax.ops.segment_sum(jnp.ones((src.shape[0],), jnp.float32), dst,
                              num_segments=n)
    h = x.astype(jnp.float32)
    for i, p in enumerate(module.params):
        xsrc = h[src]                                            # [E, Cin]
        wg = p['w'][wi]                                          # [E, S, Cin, Cout]
        msg = jnp.einsum('es,ec,escd->ed', basis, xsrc, wg)      # [E, Cout]
        agg = jax.ops.segment_sum(msg, dst, num_segments=n)
        agg = agg / jnp.maximum(deg, 1.0)[:, None]
        out = agg + h @ p['w_root'] + p['bias'][None, :]
        if not (i == module.n_layers - 1 and module.drop_act):
            out = jnp.where(out > 0, out, jnp.expm1(out))
        h = out
    if idx is not None:
        h, pos, batch = h[idx], pos[idx], batch[idx]
    return h, pos, batch


if __name__ == "__main__":
    key = jax.random.PRNGKey(0)
    n_nodes, n_edges = 16, 48
    in_ch, hid_ch, out_ch, dim = 4, 8, 8, 3

    key, kx, kp, ke1, ke2 = jax.random.split(key, 5)
    x = jax.random.normal(kx, (n_nodes, in_ch), jnp.float32)
    pos = 0.2 * jax.random.uniform(kp, (n_nodes, dim), dtype=jnp.float32)
    batch = jnp.zeros((n_nodes,), jnp.int32)
    src = jax.random.randint(ke1, (n_edges,), 0, n_nodes)
    dst = jax.random.randint(ke2, (n_edges,), 0, n_nodes)
    edge_index = jnp.stack([src, dst], axis=0)
    idx = jnp.arange(0, n_nodes, 2, dtype=jnp.int32)

    module = SplineCNNSAModulePallas(in_ch, hid_ch, out_ch, dim=dim, n_layers=3,
                                     kernel_size=5, patch_size=0.25, degree=1,
                                     drop_act=False, key=jax.random.PRNGKey(42))

    # edge_tile=16 -> 3 edge tiles x 3 layers so the init / accumulate /
    # finalize / layer-handoff grid phases are all exercised.
    out_x, out_pos, out_batch = module(x, pos, batch, idx, edge_index,
                                       edge_tile=16)
    jax.block_until_ready((out_x, out_pos, out_batch))

    ref_x, ref_pos, ref_batch = reference_forward(module, x, pos, batch, idx,
                                                  edge_index)
    assert out_x.shape == (idx.shape[0], out_ch)
    # bf16 MXU operands / bf16 basis storage (f32 accumulation) -> slightly
    # looser tolerance than pure f32.
    max_err = float(jnp.max(jnp.abs(out_x - ref_x)))
    assert jnp.allclose(out_x, ref_x, atol=2e-2, rtol=2e-2), max_err
    assert jnp.allclose(out_pos, ref_pos)
    assert jnp.array_equal(out_batch, ref_batch)
    print("KERNEL_OK")
</pallas_src>

<mosaic_0001>
module attributes {stable_mosaic.version = 11 : i64} {
  func.func @_spline_sa_kernel(%arg0: i32, %arg1: i32, %arg2: memref<3xi32, #tpu.memory_space<smem>>, %arg3: memref<16x128xf32, #tpu.memory_space<vmem>>, %arg4: memref<16x1xi32, #tpu.memory_space<vmem>>, %arg5: memref<16x1xi32, #tpu.memory_space<vmem>>, %arg6: memref<16x128xbf16, #tpu.memory_space<vmem>>, %arg7: memref<1x1024x128xbf16, #tpu.memory_space<vmem>>, %arg8: memref<1x128x128xbf16, #tpu.memory_space<vmem>>, %arg9: memref<1x1x128xf32, #tpu.memory_space<vmem>>, %arg10: memref<16x1xf32, #tpu.memory_space<vmem>>, %arg11: memref<16x128xf32, #tpu.memory_space<vmem>>, %arg12: memref<16x128xf32, #tpu.memory_space<vmem>>, %arg13: memref<16x128xf32, #tpu.memory_space<vmem>>, %arg14: memref<16x1024xbf16, #tpu.memory_space<vmem>>) attributes {dimension_semantics = [#tpu.dimension_semantics<arbitrary>, #tpu.dimension_semantics<arbitrary>], iteration_bounds = array<i64: 3, 3>, scalar_prefetch = 1 : i64, scratch_operands = 3 : i64, tpu.core_type = #tpu.core_type<tc>, window_params = [{pipeline_mode = #tpu.pipeline_mode<synchronous>, transform_indices = @transform_0, window_bounds = array<i64: 16, 128>}, {transform_indices = @transform_1, window_bounds = array<i64: 16, 1>}, {transform_indices = @transform_2, window_bounds = array<i64: 16, 1>}, {transform_indices = @transform_3, window_bounds = array<i64: 16, 128>}, {transform_indices = @transform_4, window_bounds = array<i64: 1, 1024, 128>}, {transform_indices = @transform_5, window_bounds = array<i64: 1, 128, 128>}, {transform_indices = @transform_6, window_bounds = array<i64: 1, 1, 128>}, {pipeline_mode = #tpu.pipeline_mode<synchronous>, transform_indices = @transform_7, window_bounds = array<i64: 16, 1>}, {pipeline_mode = #tpu.pipeline_mode<synchronous>, transform_indices = @transform_8, window_bounds = array<i64: 16, 128>}]} {
    %c0_i32 = arith.constant 0 : i32
    %0 = arith.cmpi eq, %arg0, %c0_i32 : i32
    %c0_i32_0 = arith.constant 0 : i32
    %1 = arith.cmpi eq, %arg1, %c0_i32_0 : i32
    %2 = arith.andi %0, %1 : i1
    %3 = arith.extui %2 : i1 to i32
    %c0_i32_1 = arith.constant 0 : i32
    %4 = arith.cmpi ne, %3, %c0_i32_1 : i32
    scf.if %4 {
      %c0_34 = arith.constant 0 : index
      %c0_35 = arith.constant 0 : index
      %84 = vector.load %arg3[%c0_34, %c0_35] : memref<16x128xf32, #tpu.memory_space<vmem>>, vector<16x128xf32>
      %c0_36 = arith.constant 0 : index
      %c0_37 = arith.constant 0 : index
      %85 = vector.load %arg12[%c0_36, %c0_37] : memref<16x128xf32, #tpu.memory_space<vmem>>, vector<16x128xf32>
      tpu.vector_store %arg12[%c0_36, %c0_37], %84 {strides = array<i32>} : memref<16x128xf32, #tpu.memory_space<vmem>>, vector<16x128xf32>,
    } else {
    }
    %c0_i32_2 = arith.constant 0 : i32
    %5 = arith.cmpi eq, %arg1, %c0_i32_2 : i32
    %6 = arith.extui %5 : i1 to i32
    %c0_i32_3 = arith.constant 0 : i32
    %7 = arith.cmpi ne, %6, %c0_i32_3 : i32
    scf.if %7 {
      %cst_34 = arith.constant 0.000000e+00 : f32
      %84 = vector.broadcast %cst_34 : f32 to vector<16x128xf32>
      %c0_35 = arith.constant 0 : index
      %c0_36 = arith.constant 0 : index
      %85 = vector.load %arg13[%c0_35, %c0_36] : memref<16x128xf32, #tpu.memory_space<vmem>>, vector<16x128xf32>
      tpu.vector_store %arg13[%c0_35, %c0_36], %84 {strides = array<i32>} : memref<16x128xf32, #tpu.memory_space<vmem>>, vector<16x128xf32>,
    } else {
    }
    %c0 = arith.constant 0 : index
    %c0_4 = arith.constant 0 : index
    %8 = vector.load %arg4[%c0, %c0_4] : memref<16x1xi32, #tpu.memory_space<vmem>>, vector<16x1xi32>
    %9 = tpu.iota {dimensions = array<i32: 1>} : vector<16x16xi32>
    %10 = vector.broadcast %8 : vector<16x1xi32> to vector<16x16xi32>
    %11 = arith.cmpi eq, %10, %9 : vector<16x16xi32>
    %cst = arith.constant 1.000000e+00 : f32
    %cst_5 = arith.constant 0.000000e+00 : f32
    %12 = vector.broadcast %cst : f32 to vector<16x16xf32>
    %13 = vector.broadcast %cst_5 : f32 to vector<16x16xf32>
    %14 = arith.select %11, %12, %13 : vector<16x16xi1>, vector<16x16xf32>
    %c0_6 = arith.constant 0 : index
    %c0_7 = arith.constant 0 : index
    %15 = vector.load %arg12[%c0_6, %c0_7] : memref<16x128xf32, #tpu.memory_space<vmem>>, vector<16x128xf32>
    %cst_8 = arith.constant dense<0.000000e+00> : vector<16x128xf32>
    %16 = tpu.matmul %14, %15, %cst_8 {dimension_numbers = #tpu.dot_dimension_numbers<[1], [0], [0], [1], [0, 0, 1, 1], [], []>} : vector<16x16xf32>, vector<16x128xf32>, vector<16x128xf32> -> vector<16x128xf32>
    %c0_9 = arith.constant 0 : index
    %c0_10 = arith.constant 0 : index
    %17 = vector.load %arg6[%c0_9, %c0_10] : memref<16x128xbf16, #tpu.memory_space<vmem>>, vector<16x128xbf16>
    %18 = arith.extf %17 : vector<16x128xbf16> to vector<16x128xf32>
    %19 = vector.extract_strided_slice %16 {offsets = [0, 0], sizes = [16, 1], strides = [1, 1]} : vector<16x128xf32> to vector<16x1xf32>
    %20 = vector.broadcast %19 : vector<16x1xf32> to vector<16x128xf32>
    %21 = arith.mulf %18, %20 : vector<16x128xf32>
    %22 = arith.truncf %21 : vector<16x128xf32> to vector<16x128xbf16>
    %c0_11 = arith.constant 0 : index
    %c0_12 = arith.constant 0 : index
    %23 = vector.load %arg14[%c0_11, %c0_12] : memref<16x1024xbf16, #tpu.memory_space<vmem>>, vector<16x128xbf16>
    tpu.vector_store %arg14[%c0_11, %c0_12], %22 {strides = array<i32>} : memref<16x1024xbf16, #tpu.memory_space<vmem>>, vector<16x128xbf16>,
    %24 = vector.extract_strided_slice %16 {offsets = [0, 1], sizes = [16, 1], strides = [1, 1]} : vector<16x128xf32> to vector<16x1xf32>
    %25 = vector.broadcast %24 : vector<16x1xf32> to vector<16x128xf32>
    %26 = arith.mulf %18, %25 : vector<16x128xf32>
    %27 = arith.truncf %26 : vector<16x128xf32> to vector<16x128xbf16>
    %c0_13 = arith.constant 0 : index
    %c128 = arith.constant 128 : index
    %28 = vector.load %arg14[%c0_13, %c128] : memref<16x1024xbf16, #tpu.memory_space<vmem>>, vector<16x128xbf16>
    tpu.vector_store %arg14[%c0_13, %c128], %27 {strides = array<i32>} : memref<16x1024xbf16, #tpu.memory_space<vmem>>, vector<16x128xbf16>,
    %29 = vector.extract_strided_slice %16 {offsets = [0, 2], sizes = [16, 1], strides = [1, 1]} : vector<16x128xf32> to vector<16x1xf32>
    %30 = vector.broadcast %29 : vector<16x1xf32> to vector<16x128xf32>
    %31 = arith.mulf %18, %30 : vector<16x128xf32>
    %32 = arith.truncf %31 : vector<16x128xf32> to vector<16x128xbf16>
    %c0_14 = arith.constant 0 : index
    %c256 = arith.constant 256 : index
    %33 = vector.load %arg14[%c0_14, %c256] : memref<16x1024xbf16, #tpu.memory_space<vmem>>, vector<16x128xbf16>
    tpu.vector_store %arg14[%c0_14, %c256], %32 {strides = array<i32>} : memref<16x1024xbf16, #tpu.memory_space<vmem>>, vector<16x128xbf16>,
    %34 = vector.extract_strided_slice %16 {offsets = [0, 3], sizes = [16, 1], strides = [1, 1]} : vector<16x128xf32> to vector<16x1xf32>
    %35 = vector.broadcast %34 : vector<16x1xf32> to vector<16x128xf32>
    %36 = arith.mulf %18, %35 : vector<16x128xf32>
    %37 = arith.truncf %36 : vector<16x128xf32> to vector<16x128xbf16>
    %c0_15 = arith.constant 0 : index
    %c384 = arith.constant 384 : index
    %38 = vector.load %arg14[%c0_15, %c384] : memref<16x1024xbf16, #tpu.memory_space<vmem>>, vector<16x128xbf16>
    tpu.vector_store %arg14[%c0_15, %c384], %37 {strides = array<i32>} : memref<16x1024xbf16, #tpu.memory_space<vmem>>, vector<16x128xbf16>,
    %39 = vector.extract_strided_slice %16 {offsets = [0, 4], sizes = [16, 1], strides = [1, 1]} : vector<16x128xf32> to vector<16x1xf32>
    %40 = vector.broadcast %39 : vector<16x1xf32> to vector<16x128xf32>
    %41 = arith.mulf %18, %40 : vector<16x128xf32>
    %42 = arith.truncf %41 : vector<16x128xf32> to vector<16x128xbf16>
    %c0_16 = arith.constant 0 : index
    %c512 = arith.constant 512 : index
    %43 = vector.load %arg14[%c0_16, %c512] : memref<16x1024xbf16, #tpu.memory_space<vmem>>, vector<16x128xbf16>
    tpu.vector_store %arg14[%c0_16, %c512], %42 {strides = array<i32>} : memref<16x1024xbf16, #tpu.memory_space<vmem>>, vector<16x128xbf16>,
    %44 = vector.extract_strided_slice %16 {offsets = [0, 5], sizes = [16, 1], strides = [1, 1]} : vector<16x128xf32> to vector<16x1xf32>
    %45 = vector.broadcast %44 : vector<16x1xf32> to vector<16x128xf32>
    %46 = arith.mulf %18, %45 : vector<16x128xf32>
    %47 = arith.truncf %46 : vector<16x128xf32> to vector<16x128xbf16>
    %c0_17 = arith.constant 0 : index
    %c640 = arith.constant 640 : index
    %48 = vector.load %arg14[%c0_17, %c640] : memref<16x1024xbf16, #tpu.memory_space<vmem>>, vector<16x128xbf16>
    tpu.vector_store %arg14[%c0_17, %c640], %47 {strides = array<i32>} : memref<16x1024xbf16, #tpu.memory_space<vmem>>, vector<16x128xbf16>,
    %49 = vector.extract_strided_slice %16 {offsets = [0, 6], sizes = [16, 1], strides = [1, 1]} : vector<16x128xf32> to vector<16x1xf32>
    %50 = vector.broadcast %49 : vector<16x1xf32> to vector<16x128xf32>
    %51 = arith.mulf %18, %50 : vector<16x128xf32>
    %52 = arith.truncf %51 : vector<16x128xf32> to vector<16x128xbf16>
    %c0_18 = arith.constant 0 : index
    %c768 = arith.constant 768 : index
    %53 = vector.load %arg14[%c0_18, %c768] : memref<16x1024xbf16, #tpu.memory_space<vmem>>, vector<16x128xbf16>
    tpu.vector_store %arg14[%c0_18, %c768], %52 {strides = array<i32>} : memref<16x1024xbf16, #tpu.memory_space<vmem>>, vector<16x128xbf16>,
    %54 = vector.extract_strided_slice %16 {offsets = [0, 7], sizes = [16, 1], strides = [1, 1]} : vector<16x128xf32> to vector<16x1xf32>
    %55 = vector.broadcast %54 : vector<16x1xf32> to vector<16x128xf32>
    %56 = arith.mulf %18, %55 : vector<16x128xf32>
    %57 = arith.truncf %56 : vector<16x128xf32> to vector<16x128xbf16>
    %c0_19 = arith.constant 0 : index
    %c896 = arith.constant 896 : index
    %58 = vector.load %arg14[%c0_19, %c896] : memref<16x1024xbf16, #tpu.memory_space<vmem>>, vector<16x128xbf16>
    tpu.vector_store %arg14[%c0_19, %c896], %57 {strides = array<i32>} : memref<16x1024xbf16, #tpu.memory_space<vmem>>, vector<16x128xbf16>,
    %c0_20 = arith.constant 0 : index
    %c0_21 = arith.constant 0 : index
    %59 = vector.load %arg14[%c0_20, %c0_21] : memref<16x1024xbf16, #tpu.memory_space<vmem>>, vector<16x1024xbf16>
    %c0_22 = arith.constant 0 : index
    %c0_23 = arith.constant 0 : index
    %c0_24 = arith.constant 0 : index
    %60 = vector.load %arg7[%c0_22, %c0_23, %c0_24] : memref<1x1024x128xbf16, #tpu.memory_space<vmem>>, vector<1x1024x128xbf16>
    %61 = vector.shape_cast %60 : vector<1x1024x128xbf16> to vector<1024x128xbf16>
    %cst_25 = arith.constant dense<0.000000e+00> : vector<16x128xf32>
    %62 = tpu.matmul %59, %61, %cst_25 {dimension_numbers = #tpu.dot_dimension_numbers<[1], [0], [0], [1], [0, 0, 1, 1], [], []>} : vector<16x1024xbf16>, vector<1024x128xbf16>, vector<16x128xf32> -> vector<16x128xf32>
    %63 = arith.index_cast %arg1 : i32 to index
    %64 = memref.load %arg2[%63] : memref<3xi32, #tpu.memory_space<smem>>
    %65 = tpu.assume_multiple %64, 8 : i32
    %c0_26 = arith.constant 0 : index
    %c0_27 = arith.constant 0 : index
    %66 = vector.load %arg5[%c0_26, %c0_27] : memref<16x1xi32, #tpu.memory_space<vmem>>, vector<16x1xi32>
    %67 = tpu.iota {dimensions = array<i32: 1>} : vector<16x16xi32>
    %68 = vector.broadcast %65 : i32 to vector<16x16xi32>
    %69 = arith.addi %67, %68 : vector<16x16xi32>
    %70 = vector.broadcast %66 : vector<16x1xi32> to vector<16x16xi32>
    %71 = arith.cmpi eq, %70, %69 : vector<16x16xi32>
    %cst_28 = arith.constant 1.000000e+00 : f32
    %cst_29 = arith.constant 0.000000e+00 : f32
    %72 = vector.broadcast %cst_28 : f32 to vector<16x16xf32>
    %73 = vector.broadcast %cst_29 : f32 to vector<16x16xf32>
    %74 = arith.select %71, %72, %73 : vector<16x16xi1>, vector<16x16xf32>
    %cst_30 = arith.constant dense<0.000000e+00> : vector<16x128xf32>
    %75 = tpu.matmul %74, %62, %cst_30 {dimension_numbers = #tpu.dot_dimension_numbers<[0], [0], [1], [1], [0, 1, 1, 1], [], []>} : vector<16x16xf32>, vector<16x128xf32>, vector<16x128xf32> -> vector<16x128xf32>
    %76 = arith.index_cast %65 : i32 to index
    %c0_31 = arith.constant 0 : index
    %77 = vector.load %arg13[%76, %c0_31] : memref<16x128xf32, #tpu.memory_space<vmem>>, vector<16x128xf32>
    %78 = arith.addf %77, %75 : vector<16x128xf32>
    %79 = arith.index_cast %65 : i32 to index
    %c0_32 = arith.constant 0 : index
    %80 = vector.load %arg13[%79, %c0_32] : memref<16x128xf32, #tpu.memory_space<vmem>>, vector<16x128xf32>
    tpu.vector_store %arg13[%79, %c0_32], %78 {strides = array<i32>} : memref<16x128xf32, #tpu.memory_space<vmem>>, vector<16x128xf32>,
    %c2_i32 = arith.constant 2 : i32
    %81 = arith.cmpi eq, %arg1, %c2_i32 : i32
    %82 = arith.extui %81 : i1 to i32
    %c0_i32_33 = arith.constant 0 : i32
    %83 = arith.cmpi ne, %82, %c0_i32_33 : i32
    scf.if %83 {
      %c0_34 = arith.constant 0 : index
      %c0_35 = arith.constant 0 : index
      %84 = vector.load %arg13[%c0_34, %c0_35] : memref<16x128xf32, #tpu.memory_space<vmem>>, vector<16x128xf32>
      %c0_36 = arith.constant 0 : index
      %c0_37 = arith.constant 0 : index
      %85 = vector.load %arg10[%c0_36, %c0_37] : memref<16x1xf32, #tpu.memory_space<vmem>>, vector<16x1xf32>
      %86 = vector.broadcast %85 : vector<16x1xf32> to vector<16x128xf32>
      %87 = arith.mulf %84, %86 : vector<16x128xf32>
      %c0_38 = arith.constant 0 : index
      %c0_39 = arith.constant 0 : index
      %88 = vector.load %arg12[%c0_38, %c0_39] : memref<16x128xf32, #tpu.memory_space<vmem>>, vector<16x128xf32>
      %89 = arith.truncf %88 : vector<16x128xf32> to vector<16x128xbf16>
      %c0_40 = arith.constant 0 : index
      %c0_41 = arith.constant 0 : index
      %c0_42 = arith.constant 0 : index
      %90 = vector.load %arg8[%c0_40, %c0_41, %c0_42] : memref<1x128x128xbf16, #tpu.memory_space<vmem>>, vector<1x128x128xbf16>
      %91 = vector.shape_cast %90 : vector<1x128x128xbf16> to vector<128x128xbf16>
      %cst_43 = arith.constant dense<0.000000e+00> : vector<16x128xf32>
      %92 = tpu.matmul %89, %91, %cst_43 {dimension_numbers = #tpu.dot_dimension_numbers<[1], [0], [0], [1], [0, 0, 1, 1], [], []>} : vector<16x128xbf16>, vector<128x128xbf16>, vector<16x128xf32> -> vector<16x128xf32>
      %93 = arith.addf %87, %92 : vector<16x128xf32>
      %c0_44 = arith.constant 0 : index
      %c0_45 = arith.constant 0 : index
      %c0_46 = arith.constant 0 : index
      %94 = vector.load %arg9[%c0_44, %c0_45, %c0_46] : memref<1x1x128xf32, #tpu.memory_space<vmem>>, vector<1x1x128xf32>
      %95 = vector.shape_cast %94 : vector<1x1x128xf32> to vector<1x128xf32>
      %96 = vector.broadcast %95 : vector<1x128xf32> to vector<16x128xf32>
      %97 = arith.addf %93, %96 : vector<16x128xf32>
      %cst_47 = arith.constant 0.000000e+00 : f32
      %98 = vector.broadcast %cst_47 : f32 to vector<16x128xf32>
      %99 = arith.minimumf %97, %98 : vector<16x128xf32>
      %cst_48 = arith.constant 5.000000e-01 : f32
      %100 = vector.broadcast %cst_48 : f32 to vector<16x128xf32>
      %101 = arith.mulf %100, %99 : vector<16x128xf32>
      %102 = math.tanh %101 : vector<16x128xf32>
      %cst_49 = arith.constant 0.000000e+00 : f32
      %103 = vector.broadcast %cst_49 : f32 to vector<16x128xf32>
      %104 = arith.cmpf ogt, %97, %103 : vector<16x128xf32>
      %cst_50 = arith.constant 2.000000e+00 : f32
      %105 = vector.broadcast %cst_50 : f32 to vector<16x128xf32>
      %106 = arith.mulf %105, %102 : vector<16x128xf32>
      %cst_51 = arith.constant 1.000000e+00 : f32
      %107 = vector.broadcast %cst_51 : f32 to vector<16x128xf32>
      %108 = arith.subf %107, %102 : vector<16x128xf32>
      %109 = arith.divf %106, %108 : vector<16x128xf32>
      %110 = arith.select %104, %97, %109 : vector<16x128xi1>, vector<16x128xf32>
      %c0_52 = arith.constant 0 : index
      %c0_53 = arith.constant 0 : index
      %111 = vector.load %arg12[%c0_52, %c0_53] : memref<16x128xf32, #tpu.memory_space<vmem>>, vector<16x128xf32>
      tpu.vector_store %arg12[%c0_52, %c0_53], %110 {strides = array<i32>} : memref<16x128xf32, #tpu.memory_space<vmem>>, vector<16x128xf32>,
      %c0_54 = arith.constant 0 : index
      %c0_55 = arith.constant 0 : index
      %112 = vector.load %arg11[%c0_54, %c0_55] : memref<16x128xf32, #tpu.memory_space<vmem>>, vector<16x128xf32>
      tpu.vector_store %arg11[%c0_54, %c0_55], %110 {strides = array<i32>} : memref<16x128xf32, #tpu.memory_space<vmem>>, vector<16x128xf32>,
    } else {
    }
    return
  }
  func.func @transform_0(%arg0: i32, %arg1: i32, %arg2: memref<3xi32, #tpu.memory_space<smem>>) -> (i32, i32) {
    %c0_i32 = arith.constant 0 : i32
    %c0_i32_0 = arith.constant 0 : i32
    %c0_i32_1 = arith.constant 0 : i32
    return %c0_i32, %c0_i32_0 : i32, i32
  }
  func.func @transform_1(%arg0: i32, %arg1: i32, %arg2: memref<3xi32, #tpu.memory_space<smem>>) -> (i32, i32) {
    %c0_i32 = arith.constant 0 : i32
    %c0_i32_0 = arith.constant 0 : i32
    return %arg1, %c0_i32 : i32, i32
  }
  func.func @transform_2(%arg0: i32, %arg1: i32, %arg2: memref<3xi32, #tpu.memory_space<smem>>) -> (i32, i32) {
    %c0_i32 = arith.constant 0 : i32
    %c0_i32_0 = arith.constant 0 : i32
    return %arg1, %c0_i32 : i32, i32
  }
  func.func @transform_3(%arg0: i32, %arg1: i32, %arg2: memref<3xi32, #tpu.memory_space<smem>>) -> (i32, i32) {
    %c0_i32 = arith.constant 0 : i32
    %c0_i32_0 = arith.constant 0 : i32
    return %arg1, %c0_i32 : i32, i32
  }
  func.func @transform_4(%arg0: i32, %arg1: i32, %arg2: memref<3xi32, #tpu.memory_space<smem>>) -> (i32, i32, i32) {
    %c0_i32 = arith.constant 0 : i32
    %c0_i32_0 = arith.constant 0 : i32
    %c0_i32_1 = arith.constant 0 : i32
    return %arg0, %c0_i32, %c0_i32_0 : i32, i32, i32
  }
  func.func @transform_5(%arg0: i32, %arg1: i32, %arg2: memref<3xi32, #tpu.memory_space<smem>>) -> (i32, i32, i32) {
    %c0_i32 = arith.constant 0 : i32
    %c0_i32_0 = arith.constant 0 : i32
    %c0_i32_1 = arith.constant 0 : i32
    return %arg0, %c0_i32, %c0_i32_0 : i32, i32, i32
  }
  func.func @transform_6(%arg0: i32, %arg1: i32, %arg2: memref<3xi32, #tpu.memory_space<smem>>) -> (i32, i32, i32) {
    %c0_i32 = arith.constant 0 : i32
    %c0_i32_0 = arith.constant 0 : i32
    %c0_i32_1 = arith.constant 0 : i32
    return %arg0, %c0_i32, %c0_i32_0 : i32, i32, i32
  }
  func.func @transform_7(%arg0: i32, %arg1: i32, %arg2: memref<3xi32, #tpu.memory_space<smem>>) -> (i32, i32) {
    %c0_i32 = arith.constant 0 : i32
    %c0_i32_0 = arith.constant 0 : i32
    %c0_i32_1 = arith.constant 0 : i32
    return %c0_i32, %c0_i32_0 : i32, i32
  }
  func.func @transform_8(%arg0: i32, %arg1: i32, %arg2: memref<3xi32, #tpu.memory_space<smem>>) -> (i32, i32) {
    %c0_i32 = arith.constant 0 : i32
    %c0_i32_0 = arith.constant 0 : i32
    %c0_i32_1 = arith.constant 0 : i32
    return %c0_i32, %c0_i32_0 : i32, i32
  }
}

</mosaic_0001>

<llo_original>
// kernel: tpu_custom_call.1
$region0: #{tpu_custom_call.1}
  #allocation0 [shape = 'u32[]', space=smem, size = 0x4, offset = 0x4, fixed_abs, tag = 'smem constant byte address 0x4 - core index']
  #allocation1 [shape = 'u32[144,128]{1,0:T(1,128)}', space=vmem, size = 0x12000, scoped, tag = 'internal scratch']
  #allocation2 [shape = 'f32[16,128]{1,0:T(8,128)}', space=vmem, size = 0x2000, scoped, tag = 'scratch operand']
  #allocation3 [shape = 'f32[16,128]{1,0:T(8,128)}', space=vmem, size = 0x2000, scoped, tag = 'scratch operand']
  #allocation4 [shape = 'bf16[16,1024]{1,0:T(16,128)(2,1)}', space=vmem, size = 0x8000, scoped, tag = 'scratch operand']
  #allocation5 [shape = 's32[1]{0}', space=sflag, size = 0x4, scoped, tag = 'scoped memory for tpu_custom_call.1']
  #allocation6 [shape = 'u8[512]{0}', space=smem, size = 0x200, scoped, tag = 'prefetched SMEM operand 0']
  %s0 = inlined_call_operand.hbm [shape: s32[3], index: 0, kind: input, shape index: {}]
  %s1 = inlined_call_operand.hbm [shape: f32[16,128], index: 1, kind: input, shape index: {}]
  %s2 = inlined_call_operand.hbm [shape: s32[48,1], index: 2, kind: input, shape index: {}]
  %s3 = inlined_call_operand.hbm [shape: s32[48,1], index: 3, kind: input, shape index: {}]
  %s4 = inlined_call_operand.hbm [shape: bf16[48,128], index: 4, kind: input, shape index: {}]
  %s5 = inlined_call_operand.hbm [shape: bf16[3,1024,128], index: 5, kind: input, shape index: {}]
  %s6 = inlined_call_operand.hbm [shape: bf16[3,128,128], index: 6, kind: input, shape index: {}]
  %s7 = inlined_call_operand.hbm [shape: f32[3,1,128], index: 7, kind: input, shape index: {}]
  %s8 = inlined_call_operand.hbm [shape: f32[16,1], index: 8, kind: input, shape index: {}]
  %s9 = inlined_call_operand.hbm [shape: f32[16,128], index: 9, kind: output, shape index: {}]
  %s10 = sld [smem:[#allocation0]]
  $region109: #{tpu_custom_call.1} parent=0
    _
  %s12 = ssub.s32 1, %s10
  %s13 = scalar_select 0, %s12, %s10
  %15 = dma.hbm_to_smem %s0, 16, [#allocation6], [#allocation5]
  %16 = dma.done [#allocation5], 16
  %17 = sfence
  $region1: #{tpu_custom_call.1} parent=0
    #allocation7 [shape = 'u8[8192]{0}', space=vmem, size = 0x2000, scoped, tag = 'input window, operand 1, single buffered']
    #allocation8 [shape = 's32[2]{0}', space=sflag, size = 0x8, scoped, tag = 'scoped memory for tpu_custom_call.1']
    #allocation9 [shape = 's32[2]{0}', space=sflag, size = 0x8, scoped, tag = 'scoped memory for tpu_custom_call.1']
    #allocation10 [shape = 'u8[16384]{0}', space=vmem, size = 0x4000, scoped, tag = 'input window, operand 2']
    #allocation11 [shape = 's32[2]{0}', space=sflag, size = 0x8, scoped, tag = 'scoped memory for tpu_custom_call.1']
    #allocation12 [shape = 'u8[16384]{0}', space=vmem, size = 0x4000, scoped, tag = 'input window, operand 3']
    #allocation13 [shape = 'u8[8192]{0}', space=vmem, size = 0x2000, scoped, tag = 'input window, operand 4']
    #allocation14 [shape = 's32[2]{0}', space=sflag, size = 0x8, scoped, tag = 'scoped memory for tpu_custom_call.1']
    #allocation15 [shape = 'u8[524288]{0}', space=vmem, size = 0x80000, scoped, tag = 'input window, operand 5']
    #allocation16 [shape = 'u8[65536]{0}', space=vmem, size = 0x10000, scoped, tag = 'input window, operand 6']
    #allocation17 [shape = 's32[2]{0}', space=sflag, size = 0x8, scoped, tag = 'scoped memory for tpu_custom_call.1']
    #allocation18 [shape = 'u8[1024]{0}', space=vmem, size = 0x400, scoped, tag = 'input window, operand 7']
    #allocation19 [shape = 'u8[8192]{0}', space=vmem, size = 0x2000, scoped, tag = 'input window, operand 8, single buffered']
    #allocation20 [shape = 's32[1]{0}', space=sflag, size = 0x4, scoped, tag = 'scoped memory for tpu_custom_call.1']
    #allocation21 [shape = 'u8[8192]{0}', space=vmem, size = 0x2000, scoped, tag = 'output window, operand 0, single buffered']
    %18 = vsyncpa [#allocation8], 0
    %19 = vsyncpa [#allocation11], 0
    %s20 = scalar_lea.sflag [#allocation11], 1
    %21 = vsyncpa %s20, 0
    %22 = vsyncpa [#allocation14], 0
    %s23 = scalar_lea.sflag [#allocation14], 1
    %24 = vsyncpa %s23, 0
    %25 = vsyncpa [#allocation17], 0
    %s26 = scalar_lea.sflag [#allocation17], 1
    %27 = vsyncpa %s26, 0
    %28 = vsyncpa [#allocation20], 0
    %29 = vsyncpa [#allocation9], 0
    loop: start=0, step=1, limit=11
    $region2: #{tpu_custom_call.1} parent=1 // loop_pre_header
      _
    $region3: #{tpu_custom_call.1} parent=1 // loop_header
      %s31 = sphi 0, %s35
      %p32 = scmp.ge.s32.totalorder %s31, 11
      %s38 = sphi 0, %s50
      %s39 = sphi 0, %s46
      %s40 = sphi 0, %s38
      %s41 = sphi 0, %s39
      %s42 = sphi 0, %s40
      %s43 = sphi 0, %s41
      %s51 = sphi 0, %s51
      %s53 = sphi 0, %s51
      %s54 = sphi 0, %s53
      %s68 = sphi 0, %s54
      %s74 = sphi 0, %s76
      %s77 = sphi 0, %s74
      %s78 = sphi 0, %s77
      %s94 = sphi 0, %s78
      %s100 = sphi 0, %s102
      %s103 = sphi 0, %s100
      %s104 = sphi 0, %s103
      %s120 = sphi 0, %s104
      %s126 = sphi 0, %s128
      %s129 = sphi 0, %s126
      %s130 = sphi 0, %s129
      %s146 = sphi 0, %s130
      %s152 = sphi 0, %s154
      %s155 = sphi 0, %s152
      %s156 = sphi 0, %s155
      %s172 = sphi 0, %s156
      %s178 = sphi 0, %s180
      %s181 = sphi 0, %s178
      %s182 = sphi 0, %s181
      %s198 = sphi 0, %s182
      %s204 = sphi 0, %s206
      %s207 = sphi 0, %s204
      %s208 = sphi 0, %s207
      %s224 = sphi 0, %s208
      %s228 = sphi 0, %s228
      %s230 = sphi 0, %s228
      %s231 = sphi 0, %s230
      %s245 = sphi 0, %s231
      %s249 = sphi 0, %s249
      %s251 = sphi 0, %s249
      %s252 = sphi 0, %s251
      %s266 = sphi 0, %s252
    $region4: #{tpu_custom_call.1} parent=1 // loop_header_branch
      %34 = sbr.rel (%p32) target = $region8
    $region5: #{tpu_custom_call.1} parent=1 // loop_body
      %s36 = ssub.s32 %s31, 1
      %s37 = ssub.s32 %s31, 2
      %s44 = sadd.s32 1, %s39
      %p45 = scmp.ge.s32.totalorder %s44, 3
      %s46 = scalar_select %p45, 0, %s44
      %s47 = sadd.s32 1, %s38
      %s48 = scalar_select %p45, %s47, %s38
      %p49 = scmp.ge.s32.totalorder %s48, 3
      %s50 = scalar_select %p49, 0, %s48
      %s52 = sadd.s32 %s51, 1
      %p55 = scmp.eq.s32.totalorder %s31, 8
      %p56 = scmp.ne.s32.totalorder %s51, %s53
      %p57 = scmp.eq.s32.totalorder %s31, 0
      %p58 = por %p56, %p57
      %p59 = scmp.ne.s32.totalorder %s51, %s53
      %p60 = scmp.eq.s32.totalorder %s36, 8
      %p61 = por %p59, %p60
      %p62 = scmp.ne.s32.totalorder %s53, %s54
      %p63 = scmp.eq.s32.totalorder %s36, 0
      %p64 = por %p62, %p63
      %p65 = scmp.ne.s32.totalorder %s53, %s54
      %p66 = scmp.eq.s32.totalorder %s37, 8
      %p67 = por %p65, %p66
      %p69 = scmp.ne.s32.totalorder %s54, %s68
      %p70 = scmp.eq.s32.totalorder %s37, 0
      %p71 = por %p69, %p70
      %s72 = ssub.s32 %s39, %s46
      %p73 = scmp.eq.s32.totalorder %s72, 0
      %s75 = sadd.s32 %s74, 1
      %s76 = scalar_select %p73, %s74, %s75
      %p79 = pneg %p73
      %p80 = scmp.eq.s32.totalorder %s31, 8
      %p81 = por %p79, %p80
      %p82 = scmp.ne.s32.totalorder %s74, %s77
      %p83 = scmp.eq.s32.totalorder %s31, 0
      %p84 = por %p82, %p83
      %p85 = scmp.ne.s32.totalorder %s74, %s77
      %p86 = scmp.eq.s32.totalorder %s36, 8
      %p87 = por %p85, %p86
      %p88 = scmp.ne.s32.totalorder %s77, %s78
      %p89 = scmp.eq.s32.totalorder %s36, 0
      %p90 = por %p88, %p89
      %p91 = scmp.ne.s32.totalorder %s77, %s78
      %p92 = scmp.eq.s32.totalorder %s37, 8
      %p93 = por %p91, %p92
      %p95 = scmp.ne.s32.totalorder %s78, %s94
      %p96 = scmp.eq.s32.totalorder %s37, 0
      %p97 = por %p95, %p96
      %s98 = ssub.s32 %s39, %s46
      %p99 = scmp.eq.s32.totalorder %s98, 0
      %s101 = sadd.s32 %s100, 1
      %s102 = scalar_select %p99, %s100, %s101
      %p105 = pneg %p99
      %p106 = scmp.eq.s32.totalorder %s31, 8
      %p107 = por %p105, %p106
      %p108 = scmp.ne.s32.totalorder %s100, %s103
      %p109 = scmp.eq.s32.totalorder %s31, 0
      %p110 = por %p108, %p109
      %p111 = scmp.ne.s32.totalorder %s100, %s103
      %p112 = scmp.eq.s32.totalorder %s36, 8
      %p113 = por %p111, %p112
      %p114 = scmp.ne.s32.totalorder %s103, %s104
      %p115 = scmp.eq.s32.totalorder %s36, 0
      %p116 = por %p114, %p115
      %p117 = scmp.ne.s32.totalorder %s103, %s104
      %p118 = scmp.eq.s32.totalorder %s37, 8
      %p119 = por %p117, %p118
      %p121 = scmp.ne.s32.totalorder %s104, %s120
      %p122 = scmp.eq.s32.totalorder %s37, 0
      %p123 = por %p121, %p122
      %s124 = ssub.s32 %s39, %s46
      %p125 = scmp.eq.s32.totalorder %s124, 0
      %s127 = sadd.s32 %s126, 1
      %s128 = scalar_select %p125, %s126, %s127
      %p131 = pneg %p125
      %p132 = scmp.eq.s32.totalorder %s31, 8
      %p133 = por %p131, %p132
      %p134 = scmp.ne.s32.totalorder %s126, %s129
      %p135 = scmp.eq.s32.totalorder %s31, 0
      %p136 = por %p134, %p135
      %p137 = scmp.ne.s32.totalorder %s126, %s129
      %p138 = scmp.eq.s32.totalorder %s36, 8
      %p139 = por %p137, %p138
      %p140 = scmp.ne.s32.totalorder %s129, %s130
      %p141 = scmp.eq.s32.totalorder %s36, 0
      %p142 = por %p140, %p141
      %p143 = scmp.ne.s32.totalorder %s129, %s130
      %p144 = scmp.eq.s32.totalorder %s37, 8
      %p145 = por %p143, %p144
      %p147 = scmp.ne.s32.totalorder %s130, %s146
      %p148 = scmp.eq.s32.totalorder %s37, 0
      %p149 = por %p147, %p148
      %s150 = ssub.s32 %s38, %s50
      %p151 = scmp.eq.s32.totalorder %s150, 0
      %s153 = sadd.s32 %s152, 1
      %s154 = scalar_select %p151, %s152, %s153
      %p157 = pneg %p151
      %p158 = scmp.eq.s32.totalorder %s31, 8
      %p159 = por %p157, %p158
      %p160 = scmp.ne.s32.totalorder %s152, %s155
      %p161 = scmp.eq.s32.totalorder %s31, 0
      %p162 = por %p160, %p161
      %p163 = scmp.ne.s32.totalorder %s152, %s155
      %p164 = scmp.eq.s32.totalorder %s36, 8
      %p165 = por %p163, %p164
      %p166 = scmp.ne.s32.totalorder %s155, %s156
      %p167 = scmp.eq.s32.totalorder %s36, 0
      %p168 = por %p166, %p167
      %p169 = scmp.ne.s32.totalorder %s155, %s156
      %p170 = scmp.eq.s32.totalorder %s37, 8
      %p171 = por %p169, %p170
      %p173 = scmp.ne.s32.totalorder %s156, %s172
      %p174 = scmp.eq.s32.totalorder %s37, 0
      %p175 = por %p173, %p174
      %s176 = ssub.s32 %s38, %s50
      %p177 = scmp.eq.s32.totalorder %s176, 0
      %s179 = sadd.s32 %s178, 1
      %s180 = scalar_select %p177, %s178, %s179
      %p183 = pneg %p177
      %p184 = scmp.eq.s32.totalorder %s31, 8
      %p185 = por %p183, %p184
      %p186 = scmp.ne.s32.totalorder %s178, %s181
      %p187 = scmp.eq.s32.totalorder %s31, 0
      %p188 = por %p186, %p187
      %p189 = scmp.ne.s32.totalorder %s178, %s181
      %p190 = scmp.eq.s32.totalorder %s36, 8
      %p191 = por %p189, %p190
      %p192 = scmp.ne.s32.totalorder %s181, %s182
      %p193 = scmp.eq.s32.totalorder %s36, 0
      %p194 = por %p192, %p193
      %p195 = scmp.ne.s32.totalorder %s181, %s182
      %p196 = scmp.eq.s32.totalorder %s37, 8
      %p197 = por %p195, %p196
      %p199 = scmp.ne.s32.totalorder %s182, %s198
      %p200 = scmp.eq.s32.totalorder %s37, 0
      %p201 = por %p199, %p200
      %s202 = ssub.s32 %s38, %s50
      %p203 = scmp.eq.s32.totalorder %s202, 0
      %s205 = sadd.s32 %s204, 1
      %s206 = scalar_select %p203, %s204, %s205
      %p209 = pneg %p203
      %p210 = scmp.eq.s32.totalorder %s31, 8
      %p211 = por %p209, %p210
      %p212 = scmp.ne.s32.totalorder %s204, %s207
      %p213 = scmp.eq.s32.totalorder %s31, 0
      %p214 = por %p212, %p213
      %p215 = scmp.ne.s32.totalorder %s204, %s207
      %p216 = scmp.eq.s32.totalorder %s36, 8
      %p217 = por %p215, %p216
      %p218 = scmp.ne.s32.totalorder %s207, %s208
      %p219 = scmp.eq.s32.totalorder %s36, 0
      %p220 = por %p218, %p219
      %p221 = scmp.ne.s32.totalorder %s207, %s208
      %p222 = scmp.eq.s32.totalorder %s37, 8
      %p223 = por %p221, %p222
      %p225 = scmp.ne.s32.totalorder %s208, %s224
      %p226 = scmp.eq.s32.totalorder %s37, 0
      %p227 = por %p225, %p226
      %s229 = sadd.s32 %s228, 1
      %p232 = scmp.eq.s32.totalorder %s31, 8
      %p233 = scmp.ne.s32.totalorder %s228, %s230
      %p234 = scmp.eq.s32.totalorder %s31, 0
      %p235 = por %p233, %p234
      %p236 = scmp.ne.s32.totalorder %s228, %s230
      %p237 = scmp.eq.s32.totalorder %s36, 8
      %p238 = por %p236, %p237
      %p239 = scmp.ne.s32.totalorder %s230, %s231
      %p240 = scmp.eq.s32.totalorder %s36, 0
      %p241 = por %p239, %p240
      %p242 = scmp.ne.s32.totalorder %s230, %s231
      %p243 = scmp.eq.s32.totalorder %s37, 8
      %p244 = por %p242, %p243
      %p246 = scmp.ne.s32.totalorder %s231, %s245
      %p247 = scmp.eq.s32.totalorder %s37, 0
      %p248 = por %p246, %p247
      %s250 = sadd.s32 %s249, 1
      %p253 = scmp.eq.s32.totalorder %s31, 8
      %p254 = scmp.ne.s32.totalorder %s249, %s251
      %p255 = scmp.eq.s32.totalorder %s31, 0
      %p256 = por %p254, %p255
      %p257 = scmp.ne.s32.totalorder %s249, %s251
      %p258 = scmp.eq.s32.totalorder %s36, 8
      %p259 = por %p257, %p258
      %p260 = scmp.ne.s32.totalorder %s251, %s252
      %p261 = scmp.eq.s32.totalorder %s36, 0
      %p262 = por %p260, %p261
      %p263 = scmp.ne.s32.totalorder %s251, %s252
      %p264 = scmp.eq.s32.totalorder %s37, 8
      %p265 = por %p263, %p264
      %p267 = scmp.ne.s32.totalorder %s252, %s266
      %p268 = scmp.eq.s32.totalorder %s37, 0
      %p269 = por %p267, %p268
      %p270 = scmp.le.s32.totalorder 1, %s31
      %p271 = scmp.lt.s32.totalorder %s31, 10
      %p272 = pnand %p270, %p271
      %p273 = pneg %p272
      // Predicated region
      $region9: #{tpu_custom_call.1} parent=5 // pred_check
        _
      $region10: #{tpu_custom_call.1} parent=5 // pred_check_branch
        %275 = sbr.rel (%p272) target = $region12
      $region11: #{tpu_custom_call.1} parent=5 // pred_region
        %s276 = ssub.s32 %s31, 1
        // Predicated region
        $region13: #{tpu_custom_call.1} parent=11 // pred_check
          %p277 = pneg %p64
        $region14: #{tpu_custom_call.1} parent=11 // pred_check_branch
          %279 = sbr.rel (%p277) target = $region16
        $region15: #{tpu_custom_call.1} parent=11 // pred_region
          %s281 = ssub.s32 256, 256
          %282 = vsyncadd [#allocation8], %s281
          %s283 = sshll.u32 [#allocation7], 4
          %s284 = int_to_ptr.vmem [resolvable:$true] %s283
          %289 = dma.hbm_to_vmem [thread:$0]  %s1, 256, %s284, [#allocation8], 128, 128, 8
        $region16: #{tpu_custom_call.1} parent=11 // pred_fallthru
          _
        // Predicated region
        $region17: #{tpu_custom_call.1} parent=11 // pred_check
          %p290 = pneg %p241
        $region18: #{tpu_custom_call.1} parent=11 // pred_check_branch
          %292 = sbr.rel (%p290) target = $region20
        $region19: #{tpu_custom_call.1} parent=11 // pred_region
          %s294 = ssub.s32 256, 256
          %295 = vsyncadd [#allocation20], %s294
          %s296 = sshll.u32 [#allocation19], 4
          %s297 = int_to_ptr.vmem [resolvable:$true] %s296
          %302 = dma.hbm_to_vmem [thread:$0]  %s8, 256, %s297, [#allocation20], 128, 128, 8
        $region20: #{tpu_custom_call.1} parent=11 // pred_fallthru
          _
      $region12: #{tpu_custom_call.1} parent=5 // pred_fallthru
        _
      %p303 = scmp.lt.s32.totalorder %s31, 9
      // Predicated region
      $region21: #{tpu_custom_call.1} parent=5 // pred_check
        %p304 = pneg %p303
      $region22: #{tpu_custom_call.1} parent=5 // pred_check_branch
        %306 = sbr.rel (%p304) target = $region24
      $region23: #{tpu_custom_call.1} parent=5 // pred_region
        // Predicated region
        $region25: #{tpu_custom_call.1} parent=23 // pred_check
          %p307 = pneg %p84
        $region26: #{tpu_custom_call.1} parent=23 // pred_check_branch
          %309 = sbr.rel (%p307) target = $region28
        $region27: #{tpu_custom_call.1} parent=23 // pred_region
          %s310 = sand.u32 %s31, 1
          %s311 = scalar_lea.sflag [#allocation11], %s310
          %s312 = sand.u32 %s74, 1
          %s313 = smul.addr %s312, 16
          %s314 = scalar_lea.vmem [#allocation10], %s313
          %s315 = smul.u32 2, %s39
          %s317 = ssub.s32 256, 256
          %318 = vsyncadd %s311, %s317
          %s319 = smul.addr %s315, 128
          %s320 = scalar_lea.hbm %s2, %s319
          %s321 = sshll.u32 %s314, 4
          %s322 = int_to_ptr.vmem [resolvable:$true] %s321
          %327 = dma.hbm_to_vmem [thread:$0]  %s320, 256, %s322, %s311, 128, 128, 8
        $region28: #{tpu_custom_call.1} parent=23 // pred_fallthru
          _
        // Predicated region
        $region29: #{tpu_custom_call.1} parent=23 // pred_check
          %p328 = pneg %p110
        $region30: #{tpu_custom_call.1} parent=23 // pred_check_branch
          %330 = sbr.rel (%p328) target = $region32
        $region31: #{tpu_custom_call.1} parent=23 // pred_region
          %s331 = sand.u32 %s31, 1
          %s332 = scalar_lea.sflag [#allocation11], %s331
          %s333 = sand.u32 %s100, 1
          %s334 = smul.addr %s333, 16
          %s335 = scalar_lea.vmem [#allocation12], %s334
          %s336 = smul.u32 2, %s39
          %s338 = ssub.s32 256, 256
          %339 = vsyncadd %s332, %s338
          %s340 = smul.addr %s336, 128
          %s341 = scalar_lea.hbm %s3, %s340
          %s342 = sshll.u32 %s335, 4
          %s343 = int_to_ptr.vmem [resolvable:$true] %s342
          %348 = dma.hbm_to_vmem [thread:$0]  %s341, 256, %s343, %s332, 128, 128, 8
        $region32: #{tpu_custom_call.1} parent=23 // pred_fallthru
          _
        // Predicated region
        $region33: #{tpu_custom_call.1} parent=23 // pred_check
          %p349 = pneg %p136
        $region34: #{tpu_custom_call.1} parent=23 // pred_check_branch
          %351 = sbr.rel (%p349) target = $region36
        $region35: #{tpu_custom_call.1} parent=23 // pred_region
          %s352 = sand.u32 %s31, 1
          %s353 = scalar_lea.sflag [#allocation14], %s352
          %s354 = sand.u32 %s126, 1
          %s355 = smul.addr %s354, 8
          %s356 = scalar_lea.vmem [#allocation13], %s355
          %s357 = smul.u32 2, %s39
          %s359 = ssub.s32 128, 128
          %360 = vsyncadd %s353, %s359
          %s361 = smul.addr %s357, 64
          %s362 = scalar_lea.hbm %s4, %s361
          %s363 = sshll.u32 %s356, 4
          %s364 = int_to_ptr.vmem [resolvable:$true] %s363
          %369 = dma.hbm_to_vmem [thread:$0]  %s362, 128, %s364, %s353, 64, 64, 4
        $region36: #{tpu_custom_call.1} parent=23 // pred_fallthru
          _
        // Predicated region
        $region37: #{tpu_custom_call.1} parent=23 // pred_check
          %p370 = pneg %p162
        $region38: #{tpu_custom_call.1} parent=23 // pred_check_branch
          %372 = sbr.rel (%p370) target = $region40
        $region39: #{tpu_custom_call.1} parent=23 // pred_region
          %s373 = sand.u32 %s31, 1
          %s374 = scalar_lea.sflag [#allocation14], %s373
          %s375 = sand.u32 %s152, 1
          %s376 = smul.addr %s375, 512
          %s377 = scalar_lea.vmem [#allocation15], %s376
          %s379 = ssub.s32 8192, 8192
          %380 = vsyncadd %s374, %s379
          %s381 = smul.addr %s38, 128
          %s382 = smul.addr %s381, 64
          %s383 = scalar_lea.hbm %s5, %s382
          %s384 = sshll.u32 %s377, 4
          %s385 = int_to_ptr.vmem [resolvable:$true] %s384
          %390 = dma.hbm_to_vmem [thread:$0]  %s383, 8192, %s385, %s374, 64, 64, 4
        $region40: #{tpu_custom_call.1} parent=23 // pred_fallthru
          _
        // Predicated region
        $region41: #{tpu_custom_call.1} parent=23 // pred_check
          %p391 = pneg %p188
        $region42: #{tpu_custom_call.1} parent=23 // pred_check_branch
          %393 = sbr.rel (%p391) target = $region44
        $region43: #{tpu_custom_call.1} parent=23 // pred_region
          %s394 = sand.u32 %s31, 1
          %s395 = scalar_lea.sflag [#allocation17], %s394
          %s396 = sand.u32 %s178, 1
          %s397 = smul.addr %s396, 64
          %s398 = scalar_lea.vmem [#allocation16], %s397
          %s400 = ssub.s32 1024, 1024
          %401 = vsyncadd %s395, %s400
          %s402 = smul.addr %s38, 16
          %s403 = smul.addr %s402, 64
          %s404 = scalar_lea.hbm %s6, %s403
          %s405 = sshll.u32 %s398, 4
          %s406 = int_to_ptr.vmem [resolvable:$true] %s405
          %411 = dma.hbm_to_vmem [thread:$0]  %s404, 1024, %s406, %s395, 64, 64, 4
        $region44: #{tpu_custom_call.1} parent=23 // pred_fallthru
          _
        // Predicated region
        $region45: #{tpu_custom_call.1} parent=23 // pred_check
          %p412 = pneg %p214
        $region46: #{tpu_custom_call.1} parent=23 // pred_check_branch
          %414 = sbr.rel (%p412) target = $region48
        $region47: #{tpu_custom_call.1} parent=23 // pred_region
          %s415 = sand.u32 %s31, 1
          %s416 = scalar_lea.sflag [#allocation17], %s415
          %s417 = sand.u32 %s204, 1
          %s418 = scalar_lea.vmem [#allocation18], %s417
          %s420 = ssub.s32 16, 16
          %421 = vsyncadd %s416, %s420
          %s422 = smul.addr %s38, 16
          %s423 = scalar_lea.hbm %s7, %s422
          %s425 = sshll.u32 %s418, 4
          %s426 = int_to_ptr.vmem [resolvable:$true] %s425
          %428 = dma.hbm_to_vmem [thread:$0]  %s423, 16, %s426, %s416
        $region48: #{tpu_custom_call.1} parent=23 // pred_fallthru
          _
      $region24: #{tpu_custom_call.1} parent=5 // pred_fallthru
        _
      %p429 = scmp.le.s32.totalorder 1, %s31
      %p430 = scmp.lt.s32.totalorder %s31, 10
      %p431 = pnand %p429, %p430
      %p432 = pneg %p431
      // Predicated region
      $region49: #{tpu_custom_call.1} parent=5 // pred_check
        _
      $region50: #{tpu_custom_call.1} parent=5 // pred_check_branch
        %434 = sbr.rel (%p431) target = $region52
      $region51: #{tpu_custom_call.1} parent=5 // pred_region
        %s435 = ssub.s32 %s31, 1
        // Predicated region
        $region53: #{tpu_custom_call.1} parent=51 // pred_check
          %p436 = pneg %p64
        $region54: #{tpu_custom_call.1} parent=51 // pred_check_branch
          %438 = sbr.rel (%p436) target = $region56
        $region55: #{tpu_custom_call.1} parent=51 // pred_region
          %439 = dma.done [#allocation8], 256
        $region56: #{tpu_custom_call.1} parent=51 // pred_fallthru
          _
        %s440 = sand.u32 %s36, 1
        %s441 = scalar_lea.sflag [#allocation11], %s440
        %s442 = sand.u32 %s77, 1
        %s443 = smul.addr %s442, 16
        %s444 = scalar_lea.vmem [#allocation10], %s443
        // Predicated region
        $region57: #{tpu_custom_call.1} parent=51 // pred_check
          %p445 = pneg %p90
        $region58: #{tpu_custom_call.1} parent=51 // pred_check_branch
          %447 = sbr.rel (%p445) target = $region60
        $region59: #{tpu_custom_call.1} parent=51 // pred_region
          %448 = dma.done %s441, 256
        $region60: #{tpu_custom_call.1} parent=51 // pred_fallthru
          _
        %s449 = sand.u32 %s36, 1
        %s450 = scalar_lea.sflag [#allocation11], %s449
        %s451 = sand.u32 %s103, 1
        %s452 = smul.addr %s451, 16
        %s453 = scalar_lea.vmem [#allocation12], %s452
        // Predicated region
        $region61: #{tpu_custom_call.1} parent=51 // pred_check
          %p454 = pneg %p116
        $region62: #{tpu_custom_call.1} parent=51 // pred_check_branch
          %456 = sbr.rel (%p454) target = $region64
        $region63: #{tpu_custom_call.1} parent=51 // pred_region
          %457 = dma.done %s450, 256
        $region64: #{tpu_custom_call.1} parent=51 // pred_fallthru
          _
        %s458 = sand.u32 %s36, 1
        %s459 = scalar_lea.sflag [#allocation14], %s458
        %s460 = sand.u32 %s129, 1
        %s461 = smul.addr %s460, 8
        %s462 = scalar_lea.vmem [#allocation13], %s461
        // Predicated region
        $region65: #{tpu_custom_call.1} parent=51 // pred_check
          %p463 = pneg %p142
        $region66: #{tpu_custom_call.1} parent=51 // pred_check_branch
          %465 = sbr.rel (%p463) target = $region68
        $region67: #{tpu_custom_call.1} parent=51 // pred_region
          %466 = dma.done %s459, 128
        $region68: #{tpu_custom_call.1} parent=51 // pred_fallthru
          _
        %s467 = sand.u32 %s36, 1
        %s468 = scalar_lea.sflag [#allocation14], %s467
        %s469 = sand.u32 %s155, 1
        %s470 = smul.addr %s469, 512
        %s471 = scalar_lea.vmem [#allocation15], %s470
        // Predicated region
        $region69: #{tpu_custom_call.1} parent=51 // pred_check
          %p472 = pneg %p168
        $region70: #{tpu_custom_call.1} parent=51 // pred_check_branch
          %474 = sbr.rel (%p472) target = $region72
        $region71: #{tpu_custom_call.1} parent=51 // pred_region
          %475 = dma.done %s468, 8192
        $region72: #{tpu_custom_call.1} parent=51 // pred_fallthru
          _
        %s476 = sand.u32 %s36, 1
        %s477 = scalar_lea.sflag [#allocation17], %s476
        %s478 = sand.u32 %s181, 1
        %s479 = smul.addr %s478, 64
        %s480 = scalar_lea.vmem [#allocation16], %s479
        // Predicated region
        $region73: #{tpu_custom_call.1} parent=51 // pred_check
          %p481 = pneg %p194
        $region74: #{tpu_custom_call.1} parent=51 // pred_check_branch
          %483 = sbr.rel (%p481) target = $region76
        $region75: #{tpu_custom_call.1} parent=51 // pred_region
          %484 = dma.done %s477, 1024
        $region76: #{tpu_custom_call.1} parent=51 // pred_fallthru
          _
        %s485 = sand.u32 %s36, 1
        %s486 = scalar_lea.sflag [#allocation17], %s485
        %s487 = sand.u32 %s207, 1
        %s488 = scalar_lea.vmem [#allocation18], %s487
        // Predicated region
        $region77: #{tpu_custom_call.1} parent=51 // pred_check
          %p489 = pneg %p220
        $region78: #{tpu_custom_call.1} parent=51 // pred_check_branch
          %491 = sbr.rel (%p489) target = $region80
        $region79: #{tpu_custom_call.1} parent=51 // pred_region
          %492 = dma.done %s486, 16
        $region80: #{tpu_custom_call.1} parent=51 // pred_fallthru
          _
        // Predicated region
        $region81: #{tpu_custom_call.1} parent=51 // pred_check
          %p493 = pneg %p241
        $region82: #{tpu_custom_call.1} parent=51 // pred_check_branch
          %495 = sbr.rel (%p493) target = $region84
        $region83: #{tpu_custom_call.1} parent=51 // pred_region
          %496 = dma.done [#allocation20], 256
        $region84: #{tpu_custom_call.1} parent=51 // pred_fallthru
          _
        %p497 = pneg %p64
        %p498 = pneg %p61
        %s499 = sand.u32 %s36, 1
        %s500 = scalar_lea.sflag [#allocation11], %s499
        %s501 = sand.u32 %s77, 1
        %s502 = smul.addr %s501, 16
        %s503 = scalar_lea.vmem [#allocation10], %s502
        %p504 = pneg %p90
        %p505 = pneg %p87
        %s506 = sand.u32 %s36, 1
        %s507 = scalar_lea.sflag [#allocation11], %s506
        %s508 = sand.u32 %s103, 1
        %s509 = smul.addr %s508, 16
        %s510 = scalar_lea.vmem [#allocation12], %s509
        %p511 = pneg %p116
        %p512 = pneg %p113
        %s513 = sand.u32 %s36, 1
        %s514 = scalar_lea.sflag [#allocation14], %s513
        %s515 = sand.u32 %s129, 1
        %s516 = smul.addr %s515, 8
        %s517 = scalar_lea.vmem [#allocation13], %s516
        %p518 = pneg %p142
        %p519 = pneg %p139
        %s520 = sand.u32 %s36, 1
        %s521 = scalar_lea.sflag [#allocation14], %s520
        %s522 = sand.u32 %s155, 1
        %s523 = smul.addr %s522, 512
        %s524 = scalar_lea.vmem [#allocation15], %s523
        %p525 = pneg %p168
        %p526 = pneg %p165
        %s527 = sand.u32 %s36, 1
        %s528 = scalar_lea.sflag [#allocation17], %s527
        %s529 = sand.u32 %s181, 1
        %s530 = smul.addr %s529, 64
        %s531 = scalar_lea.vmem [#allocation16], %s530
        %p532 = pneg %p194
        %p533 = pneg %p191
        %s534 = sand.u32 %s36, 1
        %s535 = scalar_lea.sflag [#allocation17], %s534
        %s536 = sand.u32 %s207, 1
        %s537 = scalar_lea.vmem [#allocation18], %s536
        %p538 = pneg %p220
        %p539 = pneg %p217
        %p540 = pneg %p241
        %p541 = pneg %p238
        %p542 = pneg %p262
        %p543 = pneg %p259
        %s544 = smul.u32 2, %s41
        %s545 = smul.u32 2, %s41
        %s546 = smul.u32 2, %s41
        %p548 = scmp.eq.s32.totalorder %s40, 0
        %p549 = scmp.eq.s32.totalorder %s41, 0
        %p550 = pnand %p548, %p549
        %p551 = pneg %p550
        // Predicated region
        $region85: #{tpu_custom_call.1} parent=51 // pred_check
          _
        $region86: #{tpu_custom_call.1} parent=51 // pred_check_branch
          %553 = sbr.rel (%p550) target = $region88
        $region87: #{tpu_custom_call.1} parent=51 // pred_region
          %v554 = vld [vmem:[#allocation7] sm:$0xff]
          %v555 = vld [vmem:[#allocation7 + $0x8] sm:$0xff]
          %556 = vst [vmem:[#allocation2] sm:$0xff] %v554
          %557 = vst [vmem:[#allocation2 + $0x8] sm:$0xff] %v555
        $region88: #{tpu_custom_call.1} parent=51 // pred_fallthru
          _
        // Predicated region
        $region89: #{tpu_custom_call.1} parent=51 // pred_check
          %p558 = pneg %p549
        $region90: #{tpu_custom_call.1} parent=51 // pred_check_branch
          %560 = sbr.rel (%p558) target = $region92
        $region91: #{tpu_custom_call.1} parent=51 // pred_region
          %561 = vst [vmem:[#allocation3] sm:$0xff] 0.0
          %562 = vst [vmem:[#allocation3 + $0x8] sm:$0xff] 0.0
        $region92: #{tpu_custom_call.1} parent=51 // pred_fallthru
          _
        %v563 = vld [vmem:[%s444] sm:$0xff]
        %v564 = vld [vmem:[%s444 + $0x8] sm:$0xff]
        %v565 = vlaneseq
        %v566 = vand.u32 %v565, 127
        %567 = vset.pattern.permute.xlu0 0
        %568 = vperm.xlu0 %567, %v563
        %v569 = vpop.permute.xlu0 %568
        %570 = vset.pattern.permute.xlu0 0
        %571 = vperm.xlu0 %570, %v564
        %v572 = vpop.permute.xlu0 %571
        %vm573 = vcmp.eq.s32.totalorder %v569, %v566
        %vm574 = vcmp.eq.s32.totalorder %v572, %v566
        %v575 = vsel %vm573, 1.0, 0.0
        %v576 = vsel %vm574, 1.0, 0.0
        %v577 = vld [vmem:[#allocation2] sm:$0xff]
        %v578 = vld [vmem:[#allocation2 + $0x8] sm:$0xff]
        %vm579 = vcmask 130048
        %v581 = vsel %vm579, %v575, 0
        %v584 = vsel %vm579, %v576, 0
        %586 = vmatprep.subr.mxu0 0.0
        %587 = vmatpush1.msra.mxu0 %v577
        %588 = vmatprep.subr.mxu0 0.0
        %589 = vmatpush1.msra.mxu0 %v578
        %590 = vmatprep.subr.mxu0 0.0
        %591 = vmatpush1.msra.mxu0 0.0
        %592 = vmatprep.subr.mxu0 0.0
        %593 = vmatpush1.msra.mxu0 0.0
        %594 = vmatprep.subr.mxu0 0.0
        %595 = vmatpush1.msra.mxu0 0.0
        %596 = vmatprep.subr.mxu0 0.0
        %597 = vmatpush1.msra.mxu0 0.0
        %598 = vmatprep.subr.mxu0 0.0
        %599 = vmatpush1.msra.mxu0 0.0
        %600 = vmatprep.subr.mxu0 0.0
        %601 = vmatpush1.msra.mxu0 0.0
        %602 = vmatprep.subr.mxu0 0.0
        %603 = vmatpush1.msra.mxu0 0.0
        %604 = vmatprep.subr.mxu0 0.0
        %605 = vmatpush1.msra.mxu0 0.0
        %606 = vmatprep.subr.mxu0 0.0
        %607 = vmatpush1.msra.mxu0 0.0
        %608 = vmatprep.subr.mxu0 0.0
        %609 = vmatpush1.msra.mxu0 0.0
        %610 = vmatprep.subr.mxu0 0.0
        %611 = vmatpush1.msra.mxu0 0.0
        %612 = vmatprep.subr.mxu0 0.0
        %613 = vmatpush1.msra.mxu0 0.0
        %614 = vmatprep.subr.mxu0 0.0
        %615 = vmatpush1.msra.mxu0 0.0
        %616 = vmatprep.subr.mxu0 0.0
        %617 = vmatpush1.msra.mxu0 0.0
        %618 = vmatprep.subr.mxu0 0.0
        %619 = vmatpush1.msra.mxu0 0.0
        %620 = vmatprep.subr.mxu0 0.0
        %621 = vmatpush1.msra.mxu0 0.0
        %622 = vmatprep.subr.mxu0 0.0
        %623 = vmatpush1.msra.mxu0 0.0
        %624 = vmatprep.subr.mxu0 0.0
        %625 = vmatpush1.msra.mxu0 0.0
        %626 = vmatprep.subr.mxu0 0.0
        %627 = vmatpush1.msra.mxu0 0.0
        %628 = vmatprep.subr.mxu0 0.0
        %629 = vmatpush1.msra.mxu0 0.0
        %630 = vmatprep.subr.mxu0 0.0
        %631 = vmatpush1.msra.mxu0 0.0
        %632 = vmatprep.subr.mxu0 0.0
        %633 = vmatpush1.msra.mxu0 0.0
        %634 = vmatprep.subr.mxu0 0.0
        %635 = vmatpush1.msra.mxu0 0.0
        %636 = vmatprep.subr.mxu0 0.0
        %637 = vmatpush1.msra.mxu0 0.0
        %638 = vmatprep.subr.mxu0 0.0
        %639 = vmatpush1.msra.mxu0 0.0
        %640 = vmatprep.subr.mxu0 0.0
        %641 = vmatpush1.msra.mxu0 0.0
        %642 = vmatprep.subr.mxu0 0.0
        %643 = vmatpush1.msra.mxu0 0.0
        %644 = vmatprep.subr.mxu0 0.0
        %645 = vmatpush1.msra.mxu0 0.0
        %646 = vmatprep.subr.mxu0 0.0
        %647 = vmatpush1.msra.mxu0 0.0
        %648 = vmatprep.subr.mxu0 0.0
        %649 = vmatpush1.msra.mxu0 0.0
        %650 = vmatprep.mubr.f32.mxu0 0.0
        %651 = vmatmul.mubr.f32.gmra.mrb[0].mxu0 %v581
        %v652 = vpop.f32.mrb[0].mxu0
        %v653 = vadd.f32 0.0, %v652
        %v654 = vpop.f32.mrb[0].mxu0
        %655 = vmatprep.mubr.f32.mxu0 0.0
        %656 = vmatmul.mubr.f32.gmra.mrb[0].mxu0 %v584
        %v657 = vpop.f32.mrb[0].mxu0
        %v658 = vadd.f32 0.0, %v657
        %v659 = vpop.f32.mrb[0].mxu0
        %660 = vdwg.mxu0
        %v661 = vld [vmem:[%s462] sm:$0xf]
        %v662 = vld [vmem:[%s462 + $0x4] sm:$0xf]
        %v663 = vunpack.c.l.bf16 %v661
        %v664 = vunpack.c.l.bf16 %v662
        %666 = vset.pattern.permute.xlu0 0
        %667 = vperm.xlu0 %666, %v653
        %v668 = vpop.permute.xlu0 %667
        %671 = vset.pattern.permute.xlu0 0
        %672 = vperm.xlu0 %671, %v658
        %v673 = vpop.permute.xlu0 %672
        %v675 = vmul.f32 %v663, %v668
        %v676 = vmul.f32 %v664, %v673
        %v677 = vpack.c.bf16 %v676, %v675
        %678 = vst [vmem:[#allocation4] sm:$0xff] %v677
        %679 = vset.pattern.permute.xlu0 1
        %680 = vperm.xlu0 %679, %v653
        %v681 = vpop.permute.xlu0 %680
        %683 = vset.pattern.permute.xlu0 1
        %684 = vperm.xlu0 %683, %v658
        %v685 = vpop.permute.xlu0 %684
        %v687 = vmul.f32 %v663, %v681
        %v688 = vmul.f32 %v664, %v685
        %v689 = vpack.c.bf16 %v688, %v687
        %690 = vst [vmem:[#allocation4 + $0x8] sm:$0xff] %v689
        %691 = vset.pattern.permute.xlu0 2
        %692 = vperm.xlu0 %691, %v653
        %v693 = vpop.permute.xlu0 %692
        %695 = vset.pattern.permute.xlu0 2
        %696 = vperm.xlu0 %695, %v658
        %v697 = vpop.permute.xlu0 %696
        %v699 = vmul.f32 %v663, %v693
        %v700 = vmul.f32 %v664, %v697
        %v701 = vpack.c.bf16 %v700, %v699
        %702 = vst [vmem:[#allocation4 + $0x10] sm:$0xff] %v701
        %703 = vset.pattern.permute.xlu0 3
        %704 = vperm.xlu0 %703, %v653
        %v705 = vpop.permute.xlu0 %704
        %707 = vset.pattern.permute.xlu0 3
        %708 = vperm.xlu0 %707, %v658
        %v709 = vpop.permute.xlu0 %708
        %v711 = vmul.f32 %v663, %v705
        %v712 = vmul.f32 %v664, %v709
        %v713 = vpack.c.bf16 %v712, %v711
        %714 = vst [vmem:[#allocation4 + $0x18] sm:$0xff] %v713
        %715 = vset.pattern.permute.xlu0 4
        %716 = vperm.xlu0 %715, %v653
        %v717 = vpop.permute.xlu0 %716
        %719 = vset.pattern.permute.xlu0 4
        %720 = vperm.xlu0 %719, %v658
        %v721 = vpop.permute.xlu0 %720
        %v723 = vmul.f32 %v663, %v717
        %v724 = vmul.f32 %v664, %v721
        %v725 = vpack.c.bf16 %v724, %v723
        %726 = vst [vmem:[#allocation4 + $0x20] sm:$0xff] %v725
        %727 = vset.pattern.permute.xlu0 5
        %728 = vperm.xlu0 %727, %v653
        %v729 = vpop.permute.xlu0 %728
        %731 = vset.pattern.permute.xlu0 5
        %732 = vperm.xlu0 %731, %v658
        %v733 = vpop.permute.xlu0 %732
        %v735 = vmul.f32 %v663, %v729
        %v736 = vmul.f32 %v664, %v733
        %v737 = vpack.c.bf16 %v736, %v735
        %738 = vst [vmem:[#allocation4 + $0x28] sm:$0xff] %v737
        %739 = vset.pattern.permute.xlu0 6
        %740 = vperm.xlu0 %739, %v653
        %v741 = vpop.permute.xlu0 %740
        %743 = vset.pattern.permute.xlu0 6
        %744 = vperm.xlu0 %743, %v658
        %v745 = vpop.permute.xlu0 %744
        %v747 = vmul.f32 %v663, %v741
        %v748 = vmul.f32 %v664, %v745
        %v749 = vpack.c.bf16 %v748, %v747
        %750 = vst [vmem:[#allocation4 + $0x30] sm:$0xff] %v749
        %751 = vset.pattern.permute.xlu0 7
        %752 = vperm.xlu0 %751, %v653
        %v753 = vpop.permute.xlu0 %752
        %755 = vset.pattern.permute.xlu0 7
        %756 = vperm.xlu0 %755, %v658
        %v757 = vpop.permute.xlu0 %756
        %v759 = vmul.f32 %v663, %v753
        %v760 = vmul.f32 %v664, %v757
        %v761 = vpack.c.bf16 %v760, %v759
        %762 = vst [vmem:[#allocation4 + $0x38] sm:$0xff] %v761
        %v763 = vld [vmem:[#allocation4] sm:$0xff]
        %v764 = vld [vmem:[#allocation4 + $0x8] sm:$0xff]
        %v765 = vld [vmem:[#allocation4 + $0x10] sm:$0xff]
        %v766 = vld [vmem:[#allocation4 + $0x18] sm:$0xff]
        %v767 = vld [vmem:[#allocation4 + $0x20] sm:$0xff]
        %v768 = vld [vmem:[#allocation4 + $0x28] sm:$0xff]
        %v769 = vld [vmem:[#allocation4 + $0x30] sm:$0xff]
        %v770 = vld [vmem:[#allocation4 + $0x38] sm:$0xff]
        %v771 = vld [vmem:[%s471] sm:$0xf]
        %v772 = vld [vmem:[%s471 + $0x4] sm:$0xf]
        %v773 = vld [vmem:[%s471 + $0x8] sm:$0xf]
        %v774 = vld [vmem:[%s471 + $0xc] sm:$0xf]
        %v775 = vld [vmem:[%s471 + $0x10] sm:$0xf]
        %v776 = vld [vmem:[%s471 + $0x14] sm:$0xf]
        %v777 = vld [vmem:[%s471 + $0x18] sm:$0xf]
        %v778 = vld [vmem:[%s471 + $0x1c] sm:$0xf]
        %v779 = vld [vmem:[%s471 + $0x20] sm:$0xf]
        %v780 = vld [vmem:[%s471 + $0x24] sm:$0xf]
        %v781 = vld [vmem:[%s471 + $0x28] sm:$0xf]
        %v782 = vld [vmem:[%s471 + $0x2c] sm:$0xf]
        %v783 = vld [vmem:[%s471 + $0x30] sm:$0xf]
        %v784 = vld [vmem:[%s471 + $0x34] sm:$0xf]
        %v785 = vld [vmem:[%s471 + $0x38] sm:$0xf]
        %v786 = vld [vmem:[%s471 + $0x3c] sm:$0xf]
        %v787 = vld [vmem:[%s471 + $0x40] sm:$0xf]
        %v788 = vld [vmem:[%s471 + $0x44] sm:$0xf]
        %v789 = vld [vmem:[%s471 + $0x48] sm:$0xf]
        %v790 = vld [vmem:[%s471 + $0x4c] sm:$0xf]
        %v791 = vld [vmem:[%s471 + $0x50] sm:$0xf]
        %v792 = vld [vmem:[%s471 + $0x54] sm:$0xf]
        %v793 = vld [vmem:[%s471 + $0x58] sm:$0xf]
        %v794 = vld [vmem:[%s471 + $0x5c] sm:$0xf]
        %v795 = vld [vmem:[%s471 + $0x60] sm:$0xf]
        %v796 = vld [vmem:[%s471 + $0x64] sm:$0xf]
        %v797 = vld [vmem:[%s471 + $0x68] sm:$0xf]
        %v798 = vld [vmem:[%s471 + $0x6c] sm:$0xf]
        %v799 = vld [vmem:[%s471 + $0x70] sm:$0xf]
        %v800 = vld [vmem:[%s471 + $0x74] sm:$0xf]
        %v801 = vld [vmem:[%s471 + $0x78] sm:$0xf]
        %v802 = vld [vmem:[%s471 + $0x7c] sm:$0xf]
        %v803 = vld [vmem:[%s471 + $0x80] sm:$0xf]
        %v804 = vld [vmem:[%s471 + $0x84] sm:$0xf]
        %v805 = vld [vmem:[%s471 + $0x88] sm:$0xf]
        %v806 = vld [vmem:[%s471 + $0x8c] sm:$0xf]
        %v807 = vld [vmem:[%s471 + $0x90] sm:$0xf]
        %v808 = vld [vmem:[%s471 + $0x94] sm:$0xf]
        %v809 = vld [vmem:[%s471 + $0x98] sm:$0xf]
        %v810 = vld [vmem:[%s471 + $0x9c] sm:$0xf]
        %v811 = vld [vmem:[%s471 + $0xa0] sm:$0xf]
        %v812 = vld [vmem:[%s471 + $0xa4] sm:$0xf]
        %v813 = vld [vmem:[%s471 + $0xa8] sm:$0xf]
        %v814 = vld [vmem:[%s471 + $0xac] sm:$0xf]
        %v815 = vld [vmem:[%s471 + $0xb0] sm:$0xf]
        %v816 = vld [vmem:[%s471 + $0xb4] sm:$0xf]
        %v817 = vld [vmem:[%s471 + $0xb8] sm:$0xf]
        %v818 = vld [vmem:[%s471 + $0xbc] sm:$0xf]
        %v819 = vld [vmem:[%s471 + $0xc0] sm:$0xf]
        %v820 = vld [vmem:[%s471 + $0xc4] sm:$0xf]
        %v821 = vld [vmem:[%s471 + $0xc8] sm:$0xf]
        %v822 = vld [vmem:[%s471 + $0xcc] sm:$0xf]
        %v823 = vld [vmem:[%s471 + $0xd0] sm:$0xf]
        %v824 = vld [vmem:[%s471 + $0xd4] sm:$0xf]
        %v825 = vld [vmem:[%s471 + $0xd8] sm:$0xf]
        %v826 = vld [vmem:[%s471 + $0xdc] sm:$0xf]
        %v827 = vld [vmem:[%s471 + $0xe0] sm:$0xf]
        %v828 = vld [vmem:[%s471 + $0xe4] sm:$0xf]
        %v829 = vld [vmem:[%s471 + $0xe8] sm:$0xf]
        %v830 = vld [vmem:[%s471 + $0xec] sm:$0xf]
        %v831 = vld [vmem:[%s471 + $0xf0] sm:$0xf]
        %v832 = vld [vmem:[%s471 + $0xf4] sm:$0xf]
        %v833 = vld [vmem:[%s471 + $0xf8] sm:$0xf]
        %v834 = vld [vmem:[%s471 + $0xfc] sm:$0xf]
        %v835 = vld [vmem:[%s471 + $0x100] sm:$0xf]
        %v836 = vld [vmem:[%s471 + $0x104] sm:$0xf]
        %v837 = vld [vmem:[%s471 + $0x108] sm:$0xf]
        %v838 = vld [vmem:[%s471 + $0x10c] sm:$0xf]
        %v839 = vld [vmem:[%s471 + $0x110] sm:$0xf]
        %v840 = vld [vmem:[%s471 + $0x114] sm:$0xf]
        %v841 = vld [vmem:[%s471 + $0x118] sm:$0xf]
        %v842 = vld [vmem:[%s471 + $0x11c] sm:$0xf]
        %v843 = vld [vmem:[%s471 + $0x120] sm:$0xf]
        %v844 = vld [vmem:[%s471 + $0x124] sm:$0xf]
        %v845 = vld [vmem:[%s471 + $0x128] sm:$0xf]
        %v846 = vld [vmem:[%s471 + $0x12c] sm:$0xf]
        %v847 = vld [vmem:[%s471 + $0x130] sm:$0xf]
        %v848 = vld [vmem:[%s471 + $0x134] sm:$0xf]
        %v849 = vld [vmem:[%s471 + $0x138] sm:$0xf]
        %v850 = vld [vmem:[%s471 + $0x13c] sm:$0xf]
        %v851 = vld [vmem:[%s471 + $0x140] sm:$0xf]
        %v852 = vld [vmem:[%s471 + $0x144] sm:$0xf]
        %v853 = vld [vmem:[%s471 + $0x148] sm:$0xf]
        %v854 = vld [vmem:[%s471 + $0x14c] sm:$0xf]
        %v855 = vld [vmem:[%s471 + $0x150] sm:$0xf]
        %v856 = vld [vmem:[%s471 + $0x154] sm:$0xf]
        %v857 = vld [vmem:[%s471 + $0x158] sm:$0xf]
        %v858 = vld [vmem:[%s471 + $0x15c] sm:$0xf]
        %v859 = vld [vmem:[%s471 + $0x160] sm:$0xf]
        %v860 = vld [vmem:[%s471 + $0x164] sm:$0xf]
        %v861 = vld [vmem:[%s471 + $0x168] sm:$0xf]
        %v862 = vld [vmem:[%s471 + $0x16c] sm:$0xf]
        %v863 = vld [vmem:[%s471 + $0x170] sm:$0xf]
        %v864 = vld [vmem:[%s471 + $0x174] sm:$0xf]
        %v865 = vld [vmem:[%s471 + $0x178] sm:$0xf]
        %v866 = vld [vmem:[%s471 + $0x17c] sm:$0xf]
        %v867 = vld [vmem:[%s471 + $0x180] sm:$0xf]
        %v868 = vld [vmem:[%s471 + $0x184] sm:$0xf]
        %v869 = vld [vmem:[%s471 + $0x188] sm:$0xf]
        %v870 = vld [vmem:[%s471 + $0x18c] sm:$0xf]
        %v871 = vld [vmem:[%s471 + $0x190] sm:$0xf]
        %v872 = vld [vmem:[%s471 + $0x194] sm:$0xf]
        %v873 = vld [vmem:[%s471 + $0x198] sm:$0xf]
        %v874 = vld [vmem:[%s471 + $0x19c] sm:$0xf]
        %v875 = vld [vmem:[%s471 + $0x1a0] sm:$0xf]
        %v876 = vld [vmem:[%s471 + $0x1a4] sm:$0xf]
        %v877 = vld [vmem:[%s471 + $0x1a8] sm:$0xf]
        %v878 = vld [vmem:[%s471 + $0x1ac] sm:$0xf]
        %v879 = vld [vmem:[%s471 + $0x1b0] sm:$0xf]
        %v880 = vld [vmem:[%s471 + $0x1b4] sm:$0xf]
        %v881 = vld [vmem:[%s471 + $0x1b8] sm:$0xf]
        %v882 = vld [vmem:[%s471 + $0x1bc] sm:$0xf]
        %v883 = vld [vmem:[%s471 + $0x1c0] sm:$0xf]
        %v884 = vld [vmem:[%s471 + $0x1c4] sm:$0xf]
        %v885 = vld [vmem:[%s471 + $0x1c8] sm:$0xf]
        %v886 = vld [vmem:[%s471 + $0x1cc] sm:$0xf]
        %v887 = vld [vmem:[%s471 + $0x1d0] sm:$0xf]
        %v888 = vld [vmem:[%s471 + $0x1d4] sm:$0xf]
        %v889 = vld [vmem:[%s471 + $0x1d8] sm:$0xf]
        %v890 = vld [vmem:[%s471 + $0x1dc] sm:$0xf]
        %v891 = vld [vmem:[%s471 + $0x1e0] sm:$0xf]
        %v892 = vld [vmem:[%s471 + $0x1e4] sm:$0xf]
        %v893 = vld [vmem:[%s471 + $0x1e8] sm:$0xf]
        %v894 = vld [vmem:[%s471 + $0x1ec] sm:$0xf]
        %v895 = vld [vmem:[%s471 + $0x1f0] sm:$0xf]
        %v896 = vld [vmem:[%s471 + $0x1f4] sm:$0xf]
        %v897 = vld [vmem:[%s471 + $0x1f8] sm:$0xf]
        %v898 = vld [vmem:[%s471 + $0x1fc] sm:$0xf]
        %v1027 = vunpack.c.l.b16 %v771
        %v1028 = vunpack.c.l.b16 %v772
        %v1029 = vunpack.c.l.b16 %v773
        %v1030 = vunpack.c.l.b16 %v774
        %v1031 = vunpack.c.l.b16 %v775
        %v1032 = vunpack.c.l.b16 %v776
        %v1033 = vunpack.c.l.b16 %v777
        %v1034 = vunpack.c.l.b16 %v778
        %v1035 = vunpack.c.l.b16 %v779
        %v1036 = vunpack.c.l.b16 %v780
        %v1037 = vunpack.c.l.b16 %v781
        %v1038 = vunpack.c.l.b16 %v782
        %v1039 = vunpack.c.l.b16 %v783
        %v1040 = vunpack.c.l.b16 %v784
        %v1041 = vunpack.c.l.b16 %v785
        %v1042 = vunpack.c.l.b16 %v786
        %v1043 = vunpack.c.l.b16 %v787
        %v1044 = vunpack.c.l.b16 %v788
        %v1045 = vunpack.c.l.b16 %v789
        %v1046 = vunpack.c.l.b16 %v790
        %v1047 = vunpack.c.l.b16 %v791
        %v1048 = vunpack.c.l.b16 %v792
        %v1049 = vunpack.c.l.b16 %v793
        %v1050 = vunpack.c.l.b16 %v794
        %v1051 = vunpack.c.l.b16 %v795
        %v1052 = vunpack.c.l.b16 %v796
        %v1053 = vunpack.c.l.b16 %v797
        %v1054 = vunpack.c.l.b16 %v798
        %v1055 = vunpack.c.l.b16 %v799
        %v1056 = vunpack.c.l.b16 %v800
        %v1057 = vunpack.c.l.b16 %v801
        %v1058 = vunpack.c.l.b16 %v802
        %v1059 = vunpack.c.l.b16 %v803
        %v1060 = vunpack.c.l.b16 %v804
        %v1061 = vunpack.c.l.b16 %v805
        %v1062 = vunpack.c.l.b16 %v806
        %v1063 = vunpack.c.l.b16 %v807
        %v1064 = vunpack.c.l.b16 %v808
        %v1065 = vunpack.c.l.b16 %v809
        %v1066 = vunpack.c.l.b16 %v810
        %v1067 = vunpack.c.l.b16 %v811
        %v1068 = vunpack.c.l.b16 %v812
        %v1069 = vunpack.c.l.b16 %v813
        %v1070 = vunpack.c.l.b16 %v814
        %v1071 = vunpack.c.l.b16 %v815
        %v1072 = vunpack.c.l.b16 %v816
        %v1073 = vunpack.c.l.b16 %v817
        %v1074 = vunpack.c.l.b16 %v818
        %v1075 = vunpack.c.l.b16 %v819
        %v1076 = vunpack.c.l.b16 %v820
        %v1077 = vunpack.c.l.b16 %v821
        %v1078 = vunpack.c.l.b16 %v822
        %v1079 = vunpack.c.l.b16 %v823
        %v1080 = vunpack.c.l.b16 %v824
        %v1081 = vunpack.c.l.b16 %v825
        %v1082 = vunpack.c.l.b16 %v826
        %v1083 = vunpack.c.l.b16 %v827
        %v1084 = vunpack.c.l.b16 %v828
        %v1085 = vunpack.c.l.b16 %v829
        %v1086 = vunpack.c.l.b16 %v830
        %v1087 = vunpack.c.l.b16 %v831
        %v1088 = vunpack.c.l.b16 %v832
        %v1089 = vunpack.c.l.b16 %v833
        %v1090 = vunpack.c.l.b16 %v834
        %v1091 = vunpack.c.l.b16 %v835
        %v1092 = vunpack.c.l.b16 %v836
        %v1093 = vunpack.c.l.b16 %v837
        %v1094 = vunpack.c.l.b16 %v838
        %v1095 = vunpack.c.l.b16 %v839
        %v1096 = vunpack.c.l.b16 %v840
        %v1097 = vunpack.c.l.b16 %v841
        %v1098 = vunpack.c.l.b16 %v842
        %v1099 = vunpack.c.l.b16 %v843
        %v1100 = vunpack.c.l.b16 %v844
        %v1101 = vunpack.c.l.b16 %v845
        %v1102 = vunpack.c.l.b16 %v846
        %v1103 = vunpack.c.l.b16 %v847
        %v1104 = vunpack.c.l.b16 %v848
        %v1105 = vunpack.c.l.b16 %v849
        %v1106 = vunpack.c.l.b16 %v850
        %v1107 = vunpack.c.l.b16 %v851
        %v1108 = vunpack.c.l.b16 %v852
        %v1109 = vunpack.c.l.b16 %v853
        %v1110 = vunpack.c.l.b16 %v854
        %v1111 = vunpack.c.l.b16 %v855
        %v1112 = vunpack.c.l.b16 %v856
        %v1113 = vunpack.c.l.b16 %v857
        %v1114 = vunpack.c.l.b16 %v858
        %v1115 = vunpack.c.l.b16 %v859
        %v1116 = vunpack.c.l.b16 %v860
        %v1117 = vunpack.c.l.b16 %v861
        %v1118 = vunpack.c.l.b16 %v862
        %v1119 = vunpack.c.l.b16 %v863
        %v1120 = vunpack.c.l.b16 %v864
        %v1121 = vunpack.c.l.b16 %v865
        %v1122 = vunpack.c.l.b16 %v866
        %v1123 = vunpack.c.l.b16 %v867
        %v1124 = vunpack.c.l.b16 %v868
        %v1125 = vunpack.c.l.b16 %v869
        %v1126 = vunpack.c.l.b16 %v870
        %v1127 = vunpack.c.l.b16 %v871
        %v1128 = vunpack.c.l.b16 %v872
        %v1129 = vunpack.c.l.b16 %v873
        %v1130 = vunpack.c.l.b16 %v874
        %v1131 = vunpack.c.l.b16 %v875
        %v1132 = vunpack.c.l.b16 %v876
        %v1133 = vunpack.c.l.b16 %v877
        %v1134 = vunpack.c.l.b16 %v878
        %v1135 = vunpack.c.l.b16 %v879
        %v1136 = vunpack.c.l.b16 %v880
        %v1137 = vunpack.c.l.b16 %v881
        %v1138 = vunpack.c.l.b16 %v882
        %v1139 = vunpack.c.l.b16 %v883
        %v1140 = vunpack.c.l.b16 %v884
        %v1141 = vunpack.c.l.b16 %v885
        %v1142 = vunpack.c.l.b16 %v886
        %v1143 = vunpack.c.l.b16 %v887
        %v1144 = vunpack.c.l.b16 %v888
        %v1145 = vunpack.c.l.b16 %v889
        %v1146 = vunpack.c.l.b16 %v890
        %v1147 = vunpack.c.l.b16 %v891
        %v1148 = vunpack.c.l.b16 %v892
        %v1149 = vunpack.c.l.b16 %v893
        %v1150 = vunpack.c.l.b16 %v894
        %v1151 = vunpack.c.l.b16 %v895
        %v1152 = vunpack.c.l.b16 %v896
        %v1153 = vunpack.c.l.b16 %v897
        %v1154 = vunpack.c.l.b16 %v898
        %v1155 = vpack.c.b16 %v1028, %v1027
        %v1156 = vpack.c.b16 %v1030, %v1029
        %v1157 = vpack.c.b16 %v1032, %v1031
        %v1158 = vpack.c.b16 %v1034, %v1033
        %v1159 = vpack.c.b16 %v1036, %v1035
        %v1160 = vpack.c.b16 %v1038, %v1037
        %v1161 = vpack.c.b16 %v1040, %v1039
        %v1162 = vpack.c.b16 %v1042, %v1041
        %v1163 = vpack.c.b16 %v1044, %v1043
        %v1164 = vpack.c.b16 %v1046, %v1045
        %v1165 = vpack.c.b16 %v1048, %v1047
        %v1166 = vpack.c.b16 %v1050, %v1049
        %v1167 = vpack.c.b16 %v1052, %v1051
        %v1168 = vpack.c.b16 %v1054, %v1053
        %v1169 = vpack.c.b16 %v1056, %v1055
        %v1170 = vpack.c.b16 %v1058, %v1057
        %v1171 = vpack.c.b16 %v1060, %v1059
        %v1172 = vpack.c.b16 %v1062, %v1061
        %v1173 = vpack.c.b16 %v1064, %v1063
        %v1174 = vpack.c.b16 %v1066, %v1065
        %v1175 = vpack.c.b16 %v1068, %v1067
        %v1176 = vpack.c.b16 %v1070, %v1069
        %v1177 = vpack.c.b16 %v1072, %v1071
        %v1178 = vpack.c.b16 %v1074, %v1073
        %v1179 = vpack.c.b16 %v1076, %v1075
        %v1180 = vpack.c.b16 %v1078, %v1077
        %v1181 = vpack.c.b16 %v1080, %v1079
        %v1182 = vpack.c.b16 %v1082, %v1081
        %v1183 = vpack.c.b16 %v1084, %v1083
        %v1184 = vpack.c.b16 %v1086, %v1085
        %v1185 = vpack.c.b16 %v1088, %v1087
        %v1186 = vpack.c.b16 %v1090, %v1089
        %v1187 = vpack.c.b16 %v1092, %v1091
        %v1188 = vpack.c.b16 %v1094, %v1093
        %v1189 = vpack.c.b16 %v1096, %v1095
        %v1190 = vpack.c.b16 %v1098, %v1097
        %v1191 = vpack.c.b16 %v1100, %v1099
        %v1192 = vpack.c.b16 %v1102, %v1101
        %v1193 = vpack.c.b16 %v1104, %v1103
        %v1194 = vpack.c.b16 %v1106, %v1105
        %v1195 = vpack.c.b16 %v1108, %v1107
        %v1196 = vpack.c.b16 %v1110, %v1109
        %v1197 = vpack.c.b16 %v1112, %v1111
        %v1198 = vpack.c.b16 %v1114, %v1113
        %v1199 = vpack.c.b16 %v1116, %v1115
        %v1200 = vpack.c.b16 %v1118, %v1117
        %v1201 = vpack.c.b16 %v1120, %v1119
        %v1202 = vpack.c.b16 %v1122, %v1121
        %v1203 = vpack.c.b16 %v1124, %v1123
        %v1204 = vpack.c.b16 %v1126, %v1125
        %v1205 = vpack.c.b16 %v1128, %v1127
        %v1206 = vpack.c.b16 %v1130, %v1129
        %v1207 = vpack.c.b16 %v1132, %v1131
        %v1208 = vpack.c.b16 %v1134, %v1133
        %v1209 = vpack.c.b16 %v1136, %v1135
        %v1210 = vpack.c.b16 %v1138, %v1137
        %v1211 = vpack.c.b16 %v1140, %v1139
        %v1212 = vpack.c.b16 %v1142, %v1141
        %v1213 = vpack.c.b16 %v1144, %v1143
        %v1214 = vpack.c.b16 %v1146, %v1145
        %v1215 = vpack.c.b16 %v1148, %v1147
        %v1216 = vpack.c.b16 %v1150, %v1149
        %v1217 = vpack.c.b16 %v1152, %v1151
        %v1218 = vpack.c.b16 %v1154, %v1153
        %1283 = vmatprep.subr.bf16.mxu0 0
        %1284 = vmatpush1.bf16.msra.mxu0 %v1155
        %1285 = vmatprep.subr.bf16.mxu0 0
        %1286 = vmatpush1.bf16.msra.mxu0 %v1156
        %1287 = vmatprep.subr.bf16.mxu0 0
        %1288 = vmatpush1.bf16.msra.mxu0 %v1157
        %1289 = vmatprep.subr.bf16.mxu0 0
        %1290 = vmatpush1.bf16.msra.mxu0 %v1158
        %1291 = vmatprep.subr.bf16.mxu0 0
        %1292 = vmatpush1.bf16.msra.mxu0 %v1159
        %1293 = vmatprep.subr.bf16.mxu0 0
        %1294 = vmatpush1.bf16.msra.mxu0 %v1160
        %1295 = vmatprep.subr.bf16.mxu0 0
        %1296 = vmatpush1.bf16.msra.mxu0 %v1161
        %1297 = vmatprep.subr.bf16.mxu0 0
        %1298 = vmatpush1.bf16.msra.mxu0 %v1162
        %1299 = vmatprep.subr.bf16.mxu0 0
        %1300 = vmatpush1.bf16.msra.mxu0 %v1163
        %1301 = vmatprep.subr.bf16.mxu0 0
        %1302 = vmatpush1.bf16.msra.mxu0 %v1164
        %1303 = vmatprep.subr.bf16.mxu0 0
        %1304 = vmatpush1.bf16.msra.mxu0 %v1165
        %1305 = vmatprep.subr.bf16.mxu0 0
        %1306 = vmatpush1.bf16.msra.mxu0 %v1166
        %1307 = vmatprep.subr.bf16.mxu0 0
        %1308 = vmatpush1.bf16.msra.mxu0 %v1167
        %1309 = vmatprep.subr.bf16.mxu0 0
        %1310 = vmatpush1.bf16.msra.mxu0 %v1168
        %1311 = vmatprep.subr.bf16.mxu0 0
        %1312 = vmatpush1.bf16.msra.mxu0 %v1169
        %1313 = vmatprep.subr.bf16.mxu0 0
        %1314 = vmatpush1.bf16.msra.mxu0 %v1170
        %1315 = vmatprep.mubr.bf16.mxu0 %v764
        %1316 = vmatmul.mubr.bf16.gmra.mrb[0].mxu0 %v763
        %v1317 = vpop.f32.mrb[0].mxu0
        %v1318 = vadd.f32 0.0, %v1317
        %v1319 = vpop.f32.mrb[0].mxu0
        %v1320 = vpop.f32.mrb[0].mxu0
        %v1321 = vadd.f32 0.0, %v1320
        %v1322 = vpop.f32.mrb[0].mxu0
        %1323 = vdwg.mxu0
        %1324 = vmatprep.subr.bf16.mxu0 0
        %1325 = vmatpush1.bf16.msra.mxu0 %v1171
        %1326 = vmatprep.subr.bf16.mxu0 0
        %1327 = vmatpush1.bf16.msra.mxu0 %v1172
        %1328 = vmatprep.subr.bf16.mxu0 0
        %1329 = vmatpush1.bf16.msra.mxu0 %v1173
        %1330 = vmatprep.subr.bf16.mxu0 0
        %1331 = vmatpush1.bf16.msra.mxu0 %v1174
        %1332 = vmatprep.subr.bf16.mxu0 0
        %1333 = vmatpush1.bf16.msra.mxu0 %v1175
        %1334 = vmatprep.subr.bf16.mxu0 0
        %1335 = vmatpush1.bf16.msra.mxu0 %v1176
        %1336 = vmatprep.subr.bf16.mxu0 0
        %1337 = vmatpush1.bf16.msra.mxu0 %v1177
        %1338 = vmatprep.subr.bf16.mxu0 0
        %1339 = vmatpush1.bf16.msra.mxu0 %v1178
        %1340 = vmatprep.subr.bf16.mxu0 0
        %1341 = vmatpush1.bf16.msra.mxu0 %v1179
        %1342 = vmatprep.subr.bf16.mxu0 0
        %1343 = vmatpush1.bf16.msra.mxu0 %v1180
        %1344 = vmatprep.subr.bf16.mxu0 0
        %1345 = vmatpush1.bf16.msra.mxu0 %v1181
        %1346 = vmatprep.subr.bf16.mxu0 0
        %1347 = vmatpush1.bf16.msra.mxu0 %v1182
        %1348 = vmatprep.subr.bf16.mxu0 0
        %1349 = vmatpush1.bf16.msra.mxu0 %v1183
        %1350 = vmatprep.subr.bf16.mxu0 0
        %1351 = vmatpush1.bf16.msra.mxu0 %v1184
        %1352 = vmatprep.subr.bf16.mxu0 0
        %1353 = vmatpush1.bf16.msra.mxu0 %v1185
        %1354 = vmatprep.subr.bf16.mxu0 0
        %1355 = vmatpush1.bf16.msra.mxu0 %v1186
        %1356 = vmatprep.mubr.bf16.mxu0 %v766
        %1357 = vmatmul.mubr.bf16.gmra.mrb[0].mxu0 %v765
        %v1358 = vpop.f32.mrb[0].mxu0
        %v1359 = vadd.f32 %v1318, %v1358
        %v1360 = vpop.f32.mrb[0].mxu0
        %v1361 = vpop.f32.mrb[0].mxu0
        %v1362 = vadd.f32 %v1321, %v1361
        %v1363 = vpop.f32.mrb[0].mxu0
        %1364 = vdwg.mxu0
        %1365 = vmatprep.subr.bf16.mxu0 0
        %1366 = vmatpush1.bf16.msra.mxu0 %v1187
        %1367 = vmatprep.subr.bf16.mxu0 0
        %1368 = vmatpush1.bf16.msra.mxu0 %v1188
        %1369 = vmatprep.subr.bf16.mxu0 0
        %1370 = vmatpush1.bf16.msra.mxu0 %v1189
        %1371 = vmatprep.subr.bf16.mxu0 0
        %1372 = vmatpush1.bf16.msra.mxu0 %v1190
        %1373 = vmatprep.subr.bf16.mxu0 0
        %1374 = vmatpush1.bf16.msra.mxu0 %v1191
        %1375 = vmatprep.subr.bf16.mxu0 0
        %1376 = vmatpush1.bf16.msra.mxu0 %v1192
        %1377 = vmatprep.subr.bf16.mxu0 0
        %1378 = vmatpush1.bf16.msra.mxu0 %v1193
        %1379 = vmatprep.subr.bf16.mxu0 0
        %1380 = vmatpush1.bf16.msra.mxu0 %v1194
        %1381 = vmatprep.subr.bf16.mxu0 0
        %1382 = vmatpush1.bf16.msra.mxu0 %v1195
        %1383 = vmatprep.subr.bf16.mxu0 0
        %1384 = vmatpush1.bf16.msra.mxu0 %v1196
        %1385 = vmatprep.subr.bf16.mxu0 0
        %1386 = vmatpush1.bf16.msra.mxu0 %v1197
        %1387 = vmatprep.subr.bf16.mxu0 0
        %1388 = vmatpush1.bf16.msra.mxu0 %v1198
        %1389 = vmatprep.subr.bf16.mxu0 0
        %1390 = vmatpush1.bf16.msra.mxu0 %v1199
        %1391 = vmatprep.subr.bf16.mxu0 0
        %1392 = vmatpush1.bf16.msra.mxu0 %v1200
        %1393 = vmatprep.subr.bf16.mxu0 0
        %1394 = vmatpush1.bf16.msra.mxu0 %v1201
        %1395 = vmatprep.subr.bf16.mxu0 0
        %1396 = vmatpush1.bf16.msra.mxu0 %v1202
        %1397 = vmatprep.mubr.bf16.mxu0 %v768
        %1398 = vmatmul.mubr.bf16.gmra.mrb[0].mxu0 %v767
        %v1399 = vpop.f32.mrb[0].mxu0
        %v1400 = vadd.f32 %v1359, %v1399
        %v1401 = vpop.f32.mrb[0].mxu0
        %v1402 = vpop.f32.mrb[0].mxu0
        %v1403 = vadd.f32 %v1362, %v1402
        %v1404 = vpop.f32.mrb[0].mxu0
        %1405 = vdwg.mxu0
        %1406 = vmatprep.subr.bf16.mxu0 0
        %1407 = vmatpush1.bf16.msra.mxu0 %v1203
        %1408 = vmatprep.subr.bf16.mxu0 0
        %1409 = vmatpush1.bf16.msra.mxu0 %v1204
        %1410 = vmatprep.subr.bf16.mxu0 0
        %1411 = vmatpush1.bf16.msra.mxu0 %v1205
        %1412 = vmatprep.subr.bf16.mxu0 0
        %1413 = vmatpush1.bf16.msra.mxu0 %v1206
        %1414 = vmatprep.subr.bf16.mxu0 0
        %1415 = vmatpush1.bf16.msra.mxu0 %v1207
        %1416 = vmatprep.subr.bf16.mxu0 0
        %1417 = vmatpush1.bf16.msra.mxu0 %v1208
        %1418 = vmatprep.subr.bf16.mxu0 0
        %1419 = vmatpush1.bf16.msra.mxu0 %v1209
        %1420 = vmatprep.subr.bf16.mxu0 0
        %1421 = vmatpush1.bf16.msra.mxu0 %v1210
        %1422 = vmatprep.subr.bf16.mxu0 0
        %1423 = vmatpush1.bf16.msra.mxu0 %v1211
        %1424 = vmatprep.subr.bf16.mxu0 0
        %1425 = vmatpush1.bf16.msra.mxu0 %v1212
        %1426 = vmatprep.subr.bf16.mxu0 0
        %1427 = vmatpush1.bf16.msra.mxu0 %v1213
        %1428 = vmatprep.subr.bf16.mxu0 0
        %1429 = vmatpush1.bf16.msra.mxu0 %v1214
        %1430 = vmatprep.subr.bf16.mxu0 0
        %1431 = vmatpush1.bf16.msra.mxu0 %v1215
        %1432 = vmatprep.subr.bf16.mxu0 0
        %1433 = vmatpush1.bf16.msra.mxu0 %v1216
        %1434 = vmatprep.subr.bf16.mxu0 0
        %1435 = vmatpush1.bf16.msra.mxu0 %v1217
        %1436 = vmatprep.subr.bf16.mxu0 0
        %1437 = vmatpush1.bf16.msra.mxu0 %v1218
        %1438 = vmatprep.mubr.bf16.mxu0 %v770
        %1439 = vmatmul.mubr.bf16.gmra.mrb[0].mxu0 %v769
        %v1440 = vpop.f32.mrb[0].mxu0
        %v1441 = vadd.f32 %v1400, %v1440
        %v1442 = vpop.f32.mrb[0].mxu0
        %v1443 = vpop.f32.mrb[0].mxu0
        %v1444 = vadd.f32 %v1403, %v1443
        %v1445 = vpop.f32.mrb[0].mxu0
        %1446 = vdwg.mxu0
        %s1447 = sld [smem:[#allocation6 + %s41]]
        %v1448 = vld [vmem:[%s453] sm:$0xff]
        %v1449 = vld [vmem:[%s453 + $0x8] sm:$0xff]
        %v1450 = vstv %s1447
        %v1451 = vadd.s32 %v566, %v1450
        %1452 = vset.pattern.permute.xlu0 0
        %1453 = vperm.xlu0 %1452, %v1448
        %v1454 = vpop.permute.xlu0 %1453
        %1455 = vset.pattern.permute.xlu0 0
        %1456 = vperm.xlu0 %1455, %v1449
        %v1457 = vpop.permute.xlu0 %1456
        %vm1458 = vcmp.eq.s32.totalorder %v1454, %v1451
        %vm1459 = vcmp.eq.s32.totalorder %v1457, %v1451
        %v1460 = vsel %vm1458, 1.0, 0.0
        %v1461 = vsel %vm1459, 1.0, 0.0
        %1462 = vxpose.xlu0.b32.start [1/16] %v1460, 128
        %1463 = vxpose.xlu0.b32.cont [2/16] %v1461, 128
        %1464 = vxpose.xlu0.b32.cont [3/16] 0.0, 128
        %1465 = vxpose.xlu0.b32.cont [4/16] 0.0, 128
        %1466 = vxpose.xlu0.b32.cont [5/16] 0.0, 128
        %1467 = vxpose.xlu0.b32.cont [6/16] 0.0, 128
        %1468 = vxpose.xlu0.b32.cont [7/16] 0.0, 128
        %1469 = vxpose.xlu0.b32.cont [8/16] 0.0, 128
        %1470 = vxpose.xlu0.b32.cont [9/16] 0.0, 128
        %1471 = vxpose.xlu0.b32.cont [10/16] 0.0, 128
        %1472 = vxpose.xlu0.b32.cont [11/16] 0.0, 128
        %1473 = vxpose.xlu0.b32.cont [12/16] 0.0, 128
        %1474 = vxpose.xlu0.b32.cont [13/16] 0.0, 128
        %1475 = vxpose.xlu0.b32.cont [14/16] 0.0, 128
        %1476 = vxpose.xlu0.b32.cont [15/16] 0.0, 128
        %1477 = vxpose.xlu0.b32.end [16/16] 0.0, 128
        %v1478 = vpop.trf.xlu0
        %v1479 = vpop.trf.xlu0
        %v1480 = vpop.trf.xlu0
        %v1481 = vpop.trf.xlu0
        %v1482 = vpop.trf.xlu0
        %v1483 = vpop.trf.xlu0
        %v1484 = vpop.trf.xlu0
        %v1485 = vpop.trf.xlu0
        %v1486 = vpop.trf.xlu0
        %v1487 = vpop.trf.xlu0
        %v1488 = vpop.trf.xlu0
        %v1489 = vpop.trf.xlu0
        %v1490 = vpop.trf.xlu0
        %v1491 = vpop.trf.xlu0
        %v1492 = vpop.trf.xlu0
        %v1493 = vpop.trf.xlu0
        %v1495 = vsel %vm579, %v1478, 0
        %v1498 = vsel %vm579, %v1479, 0
        %1500 = vmatprep.subr.mxu0 0.0
        %1501 = vmatpush1.msra.mxu0 %v1441
        %1502 = vmatprep.subr.mxu0 0.0
        %1503 = vmatpush1.msra.mxu0 %v1444
        %1504 = vmatprep.subr.mxu0 0.0
        %1505 = vmatpush1.msra.mxu0 0.0
        %1506 = vmatprep.subr.mxu0 0.0
        %1507 = vmatpush1.msra.mxu0 0.0
        %1508 = vmatprep.subr.mxu0 0.0
        %1509 = vmatpush1.msra.mxu0 0.0
        %1510 = vmatprep.subr.mxu0 0.0
        %1511 = vmatpush1.msra.mxu0 0.0
        %1512 = vmatprep.subr.mxu0 0.0
        %1513 = vmatpush1.msra.mxu0 0.0
        %1514 = vmatprep.subr.mxu0 0.0
        %1515 = vmatpush1.msra.mxu0 0.0
        %1516 = vmatprep.subr.mxu0 0.0
        %1517 = vmatpush1.msra.mxu0 0.0
        %1518 = vmatprep.subr.mxu0 0.0
        %1519 = vmatpush1.msra.mxu0 0.0
        %1520 = vmatprep.subr.mxu0 0.0
        %1521 = vmatpush1.msra.mxu0 0.0
        %1522 = vmatprep.subr.mxu0 0.0
        %1523 = vmatpush1.msra.mxu0 0.0
        %1524 = vmatprep.subr.mxu0 0.0
        %1525 = vmatpush1.msra.mxu0 0.0
        %1526 = vmatprep.subr.mxu0 0.0
        %1527 = vmatpush1.msra.mxu0 0.0
        %1528 = vmatprep.subr.mxu0 0.0
        %1529 = vmatpush1.msra.mxu0 0.0
        %1530 = vmatprep.subr.mxu0 0.0
        %1531 = vmatpush1.msra.mxu0 0.0
        %1532 = vmatprep.subr.mxu0 0.0
        %1533 = vmatpush1.msra.mxu0 0.0
        %1534 = vmatprep.subr.mxu0 0.0
        %1535 = vmatpush1.msra.mxu0 0.0
        %1536 = vmatprep.subr.mxu0 0.0
        %1537 = vmatpush1.msra.mxu0 0.0
        %1538 = vmatprep.subr.mxu0 0.0
        %1539 = vmatpush1.msra.mxu0 0.0
        %1540 = vmatprep.subr.mxu0 0.0
        %1541 = vmatpush1.msra.mxu0 0.0
        %1542 = vmatprep.subr.mxu0 0.0
        %1543 = vmatpush1.msra.mxu0 0.0
        %1544 = vmatprep.subr.mxu0 0.0
        %1545 = vmatpush1.msra.mxu0 0.0
        %1546 = vmatprep.subr.mxu0 0.0
        %1547 = vmatpush1.msra.mxu0 0.0
        %1548 = vmatprep.subr.mxu0 0.0
        %1549 = vmatpush1.msra.mxu0 0.0
        %1550 = vmatprep.subr.mxu0 0.0
        %1551 = vmatpush1.msra.mxu0 0.0
        %1552 = vmatprep.subr.mxu0 0.0
        %1553 = vmatpush1.msra.mxu0 0.0
        %1554 = vmatprep.subr.mxu0 0.0
        %1555 = vmatpush1.msra.mxu0 0.0
        %1556 = vmatprep.subr.mxu0 0.0
        %1557 = vmatpush1.msra.mxu0 0.0
        %1558 = vmatprep.subr.mxu0 0.0
        %1559 = vmatpush1.msra.mxu0 0.0
        %1560 = vmatprep.subr.mxu0 0.0
        %1561 = vmatpush1.msra.mxu0 0.0
        %1562 = vmatprep.subr.mxu0 0.0
        %1563 = vmatpush1.msra.mxu0 0.0
        %1564 = vmatprep.mubr.f32.mxu0 0.0
        %1565 = vmatmul.mubr.f32.gmra.mrb[0].mxu0 %v1495
        %v1566 = vpop.f32.mrb[0].mxu0
        %v1567 = vadd.f32 0.0, %v1566
        %v1568 = vpop.f32.mrb[0].mxu0
        %1569 = vmatprep.mubr.f32.mxu0 0.0
        %1570 = vmatmul.mubr.f32.gmra.mrb[0].mxu0 %v1498
        %v1571 = vpop.f32.mrb[0].mxu0
        %v1572 = vadd.f32 0.0, %v1571
        %v1573 = vpop.f32.mrb[0].mxu0
        %1574 = vdwg.mxu0
        %s1575 = scalar_lea.vmem [#allocation3], %s1447
        %v1576 = vld [vmem:[%s1575] sm:$0xff]
        %v1577 = vld [vmem:[%s1575 + $0x8] sm:$0xff]
        %v1578 = vadd.f32 %v1576, %v1567
        %v1579 = vadd.f32 %v1577, %v1572
        %1580 = vst [vmem:[%s1575] sm:$0xff] %v1578
        %1581 = vst [vmem:[%s1575 + $0x8] sm:$0xff] %v1579
        %p1582 = scmp.eq.s32.totalorder %s41, 2
        // Predicated region
        $region93: #{tpu_custom_call.1} parent=51 // pred_check
          %p1583 = pneg %p1582
        $region94: #{tpu_custom_call.1} parent=51 // pred_check_branch
          %1585 = sbr.rel (%p1583) target = $region96
        $region95: #{tpu_custom_call.1} parent=51 // pred_region
          %v1586 = vld [vmem:[#allocation3] sm:$0xff]
          %v1587 = vld [vmem:[#allocation3 + $0x8] sm:$0xff]
          %v1588 = vld [vmem:[#allocation19] sm:$0xff]
          %v1589 = vld [vmem:[#allocation19 + $0x8] sm:$0xff]
          %1591 = vset.pattern.permute.xlu0 0
          %1592 = vperm.xlu0 %1591, %v1588
          %v1593 = vpop.permute.xlu0 %1592
          %1596 = vset.pattern.permute.xlu0 0
          %1597 = vperm.xlu0 %1596, %v1589
          %v1598 = vpop.permute.xlu0 %1597
          %v1600 = vmul.f32 %v1586, %v1593
          %v1601 = vmul.f32 %v1587, %v1598
          %v1602 = vld [vmem:[#allocation2] sm:$0xff]
          %v1603 = vld [vmem:[#allocation2 + $0x8] sm:$0xff]
          %v1604 = vpack.c.bf16 %v1603, %v1602
          %v1605 = vld [vmem:[%s480] sm:$0xf]
          %v1606 = vld [vmem:[%s480 + $0x4] sm:$0xf]
          %v1607 = vld [vmem:[%s480 + $0x8] sm:$0xf]
          %v1608 = vld [vmem:[%s480 + $0xc] sm:$0xf]
          %v1609 = vld [vmem:[%s480 + $0x10] sm:$0xf]
          %v1610 = vld [vmem:[%s480 + $0x14] sm:$0xf]
          %v1611 = vld [vmem:[%s480 + $0x18] sm:$0xf]
          %v1612 = vld [vmem:[%s480 + $0x1c] sm:$0xf]
          %v1613 = vld [vmem:[%s480 + $0x20] sm:$0xf]
          %v1614 = vld [vmem:[%s480 + $0x24] sm:$0xf]
          %v1615 = vld [vmem:[%s480 + $0x28] sm:$0xf]
          %v1616 = vld [vmem:[%s480 + $0x2c] sm:$0xf]
          %v1617 = vld [vmem:[%s480 + $0x30] sm:$0xf]
          %v1618 = vld [vmem:[%s480 + $0x34] sm:$0xf]
          %v1619 = vld [vmem:[%s480 + $0x38] sm:$0xf]
          %v1620 = vld [vmem:[%s480 + $0x3c] sm:$0xf]
          %v1637 = vunpack.c.l.b16 %v1605
          %v1638 = vunpack.c.l.b16 %v1606
          %v1639 = vunpack.c.l.b16 %v1607
          %v1640 = vunpack.c.l.b16 %v1608
          %v1641 = vunpack.c.l.b16 %v1609
          %v1642 = vunpack.c.l.b16 %v1610
          %v1643 = vunpack.c.l.b16 %v1611
          %v1644 = vunpack.c.l.b16 %v1612
          %v1645 = vunpack.c.l.b16 %v1613
          %v1646 = vunpack.c.l.b16 %v1614
          %v1647 = vunpack.c.l.b16 %v1615
          %v1648 = vunpack.c.l.b16 %v1616
          %v1649 = vunpack.c.l.b16 %v1617
          %v1650 = vunpack.c.l.b16 %v1618
          %v1651 = vunpack.c.l.b16 %v1619
          %v1652 = vunpack.c.l.b16 %v1620
          %v1653 = vpack.c.b16 %v1638, %v1637
          %v1654 = vpack.c.b16 %v1640, %v1639
          %v1655 = vpack.c.b16 %v1642, %v1641
          %v1656 = vpack.c.b16 %v1644, %v1643
          %v1657 = vpack.c.b16 %v1646, %v1645
          %v1658 = vpack.c.b16 %v1648, %v1647
          %v1659 = vpack.c.b16 %v1650, %v1649
          %v1660 = vpack.c.b16 %v1652, %v1651
          %1669 = vmatprep.subr.bf16.mxu0 0
          %1670 = vmatpush1.bf16.msra.mxu0 %v1653
          %1671 = vmatprep.subr.bf16.mxu0 0
          %1672 = vmatpush1.bf16.msra.mxu0 %v1654
          %1673 = vmatprep.subr.bf16.mxu0 0
          %1674 = vmatpush1.bf16.msra.mxu0 %v1655
          %1675 = vmatprep.subr.bf16.mxu0 0
          %1676 = vmatpush1.bf16.msra.mxu0 %v1656
          %1677 = vmatprep.subr.bf16.mxu0 0
          %1678 = vmatpush1.bf16.msra.mxu0 %v1657
          %1679 = vmatprep.subr.bf16.mxu0 0
          %1680 = vmatpush1.bf16.msra.mxu0 %v1658
          %1681 = vmatprep.subr.bf16.mxu0 0
          %1682 = vmatpush1.bf16.msra.mxu0 %v1659
          %1683 = vmatprep.subr.bf16.mxu0 0
          %1684 = vmatpush1.bf16.msra.mxu0 %v1660
          %1685 = vmatprep.subr.bf16.mxu0 0
          %1686 = vmatpush1.bf16.msra.mxu0 0
          %1687 = vmatprep.subr.bf16.mxu0 0
          %1688 = vmatpush1.bf16.msra.mxu0 0
          %1689 = vmatprep.subr.bf16.mxu0 0
          %1690 = vmatpush1.bf16.msra.mxu0 0
          %1691 = vmatprep.subr.bf16.mxu0 0
          %1692 = vmatpush1.bf16.msra.mxu0 0
          %1693 = vmatprep.subr.bf16.mxu0 0
          %1694 = vmatpush1.bf16.msra.mxu0 0
          %1695 = vmatprep.subr.bf16.mxu0 0
          %1696 = vmatpush1.bf16.msra.mxu0 0
          %1697 = vmatprep.subr.bf16.mxu0 0
          %1698 = vmatpush1.bf16.msra.mxu0 0
          %1699 = vmatprep.subr.bf16.mxu0 0
          %1700 = vmatpush1.bf16.msra.mxu0 0
          %1701 = vmatprep.mubr.bf16.mxu0 0
          %1702 = vmatmul.mubr.bf16.gmra.mrb[0].mxu0 %v1604
          %v1703 = vpop.f32.mrb[0].mxu0
          %v1704 = vadd.f32 0.0, %v1703
          %v1705 = vpop.f32.mrb[0].mxu0
          %v1706 = vpop.f32.mrb[0].mxu0
          %v1707 = vadd.f32 0.0, %v1706
          %v1708 = vpop.f32.mrb[0].mxu0
          %1709 = vdwg.mxu0
          %v1710 = vadd.f32 %v1600, %v1704
          %v1711 = vadd.f32 %v1601, %v1707
          %v1712 = vld [vmem:[%s488] sm:$0x1]
          %v1714 = vlaneseq
          %v1715 = vshrl.u32 %v1714, 7
          %v1716 = vsub.s32 0, %v1715
          %v1717 = vrot.slane %v1712, %v1716
          %v1719 = vadd.f32 %v1710, %v1717
          %v1720 = vadd.f32 %v1711, %v1717
          %v1721 = vmin.f32 %v1719, 0.0
          %v1722 = vmin.f32 %v1720, 0.0
          %v1723 = vmul.f32 %v1721, 0.5
          %v1724 = vmul.f32 %v1722, 0.5
          %v1725 = vtanh.pop %v1723
          %v1726 = vtanh.pop %v1724
          %vm1727 = vcmp.gt.f32.partialorder %v1719, 0.0
          %vm1728 = vcmp.gt.f32.partialorder %v1720, 0.0
          %v1729 = vmul.f32 %v1725, 2.0
          %v1730 = vmul.f32 %v1726, 2.0
          %v1731 = vsub.f32 1.0, %v1725
          %v1732 = vsub.f32 1.0, %v1726
          %v1733 = vrcp.pop %v1731
          %v1734 = vmul.f32 %v1729, %v1733
          %v1735 = vrcp.pop %v1732
          %v1736 = vmul.f32 %v1730, %v1735
          %v1737 = vsel %vm1727, %v1719, %v1734
          %v1738 = vsel %vm1728, %v1720, %v1736
          %1739 = vst [vmem:[#allocation2] sm:$0xff] %v1737
          %1740 = vst [vmem:[#allocation2 + $0x8] sm:$0xff] %v1738
          %1741 = vst [vmem:[#allocation21] sm:$0xff] %v1737
          %1742 = vst [vmem:[#allocation21 + $0x8] sm:$0xff] %v1738
        $region96: #{tpu_custom_call.1} parent=51 // pred_fallthru
          _
        // Predicated region
        $region97: #{tpu_custom_call.1} parent=51 // pred_check
          %p1743 = pneg %p259
        $region98: #{tpu_custom_call.1} parent=51 // pred_check_branch
          %1745 = sbr.rel (%p1743) target = $region100
        $region99: #{tpu_custom_call.1} parent=51 // pred_region
          %s1747 = ssub.s32 256, 256
          %1748 = vsyncadd [#allocation9], %s1747
          %s1749 = sshll.u32 [#allocation21], 4
          %s1750 = int_to_ptr.vmem [resolvable:$true] %s1749
          %1755 = dma.vmem_to_hbm [thread:$0]  %s1750, 256, %s9, [#allocation9], 128, 128, 8
        $region100: #{tpu_custom_call.1} parent=51 // pred_fallthru
          _
        // Predicated region
        $region101: #{tpu_custom_call.1} parent=51 // pred_check
          %p1756 = pneg %p259
        $region102: #{tpu_custom_call.1} parent=51 // pred_check_branch
          %1758 = sbr.rel (%p1756) target = $region104
        $region103: #{tpu_custom_call.1} parent=51 // pred_region
          %1759 = dma.done [#allocation9], 256
        $region104: #{tpu_custom_call.1} parent=51 // pred_fallthru
          _
      $region52: #{tpu_custom_call.1} parent=5 // pred_fallthru
        _
      %p1760 = scmp.le.s32.totalorder 2, %s31
      // Predicated region
      $region105: #{tpu_custom_call.1} parent=5 // pred_check
        %p1761 = pneg %p1760
      $region106: #{tpu_custom_call.1} parent=5 // pred_check_branch
        %1763 = sbr.rel (%p1761) target = $region108
      $region107: #{tpu_custom_call.1} parent=5 // pred_region
        %s1764 = ssub.s32 %s31, 2
      $region108: #{tpu_custom_call.1} parent=5 // pred_fallthru
        _
    $region6: #{tpu_custom_call.1} parent=1 // loop_footer
      %s35 = sadd.s32 1, %s31
    $region7: #{tpu_custom_call.1} parent=1 // loop_footer_branch
      %30 = sbr.rel target = $region3
    $region8: #{tpu_custom_call.1} parent=1 // loop_exit
      _
    %1765 = vsyncpa [#allocation8], 1
    %s1766 = scalar_lea.sflag [#allocation8], 1
    %1767 = vsyncpa %s1766, 1
    %1768 = vsyncpa [#allocation11], 1
    %s1769 = scalar_lea.sflag [#allocation11], 1
    %1770 = vsyncpa %s1769, 1
    %1771 = vsyncpa [#allocation14], 1
    %s1772 = scalar_lea.sflag [#allocation14], 1
    %1773 = vsyncpa %s1772, 1
    %1774 = vsyncpa [#allocation17], 1
    %s1775 = scalar_lea.sflag [#allocation17], 1
    %1776 = vsyncpa %s1775, 1
    %1777 = vsyncpa [#allocation20], 1
    %1778 = vsyncpa [#allocation9], 1
    %s1779 = scalar_lea.sflag [#allocation9], 1
    %1780 = vsyncpa %s1779, 1

</llo_original>
